<compile_context>
chip_gen: v5e
topology: v5e:2x2
jax: 0.10.0
libtpu: 0.0.40
codegen_flags: <defaults>
</compile_context>

<pallas_src>
import functools

import jax
import jax.numpy as jnp
from jax import lax
from jax.experimental import pallas as pl
from jax.experimental.pallas import tpu as pltpu


# ---------------------------------------------------------------------------
# Kernel A: fused H-upsample + 3x3 conv (single K=9*Cin matmul) + BN partials.
#   xt_ref : (th//2 + 2, W2, Cin)  W-upsampled, H-edge-padded rows (with halo)
#   w_ref  : (Cout, 9*Cin)         conv weights, flat index (dy*3+dx)*Cin + ci
#   y_ref  : (Cout, th*W2)         conv output block, channel-major
#   stat_ref: (Cout, 2)            per-block [sum, sum of squares]
# ---------------------------------------------------------------------------
def _upconv_kernel(xt_ref, w_ref, y_ref, stat_ref, *, th, w2, cin):
    th2 = th // 2
    r = pl.program_id(1)
    nr = pl.num_programs(1)

    a = xt_ref[...]                                   # (th2+2, w2, cin)
    s0 = a[0:th2 + 1]
    s1 = a[1:th2 + 2]
    u_even = 0.25 * s0 + 0.75 * s1                    # upsampled rows r*th+2j
    u_odd = 0.75 * s0 + 0.25 * s1                     # upsampled rows r*th-1+2j
    # interleave -> halo rows t = 0..th+1 (global upsampled rows r*th-1..r*th+th)
    u = jnp.stack([u_odd, u_even], axis=1).reshape(th + 2, w2, cin)

    # conv zero-padding rows at the image top / bottom boundaries
    row = lax.broadcasted_iota(jnp.int32, (th + 2, 1, 1), 0)
    top = jnp.logical_and(r == 0, row == 0)
    bot = jnp.logical_and(r == nr - 1, row == th + 1)
    u = jnp.where(jnp.logical_or(top, bot), 0.0, u)

    # conv zero-padding columns
    zcol = jnp.zeros((th + 2, 1, cin), u.dtype)
    up = jnp.concatenate([zcol, u, zcol], axis=1)     # (th+2, w2+2, cin)

    # im2col -> one (M, 9*cin) operand -> single MXU matmul with K = 9*cin
    taps = [up[dy:dy + th, dx:dx + w2, :] for dy in range(3) for dx in range(3)]
    patch = jnp.concatenate(taps, axis=-1).reshape(th * w2, 9 * cin)

    # (cout, 9cin) x (M, 9cin), contracted on the last dims -> (cout, M)
    # (channel-major result => lane-dense stores, no trailing transpose)
    yblk = lax.dot_general(w_ref[...], patch, (((1,), (1,)), ((), ())),
                           preferred_element_type=jnp.float32)
    y_ref[...] = yblk

    # BatchNorm partial statistics for this block (rides VPU/XLU under the MXU)
    ps = jnp.sum(yblk, axis=1, keepdims=True)         # (cout, 1)
    pss = jnp.sum(yblk * yblk, axis=1, keepdims=True)
    stat_ref[...] = jnp.concatenate([ps, pss], axis=1)


# ---------------------------------------------------------------------------
# Kernel B: fused BatchNorm (precomputed scale/shift) + ReLU, channel-major.
# ---------------------------------------------------------------------------
def _bn_relu_kernel(y_ref, scale_ref, shift_ref, out_ref):
    out_ref[...] = jnp.maximum(y_ref[...] * scale_ref[...] + shift_ref[...], 0.0)


def _pick_tile_rows(h2, w2):
    """Even divisor of h2; ~h2/4 upsampled rows per tile, bounded matmul M."""
    best = 2
    for th in range(2, h2 + 1, 2):
        if h2 % th != 0:
            continue
        if th <= max(2, h2 // 4) and th * w2 <= 8192:
            best = th
    return best


# ---------------------------------------------------------------------------
# Full UpConvBlock forward: NCHW in / NCHW out.
# ---------------------------------------------------------------------------
def up_conv_block_forward(x_nchw, params, *, eps=1e-5):
    w = params["w"]                    # (Cout, Cin, 3, 3); bias dropped: under
    gamma, beta = params["gamma"], params["beta"]   # training-mode BN a constant
    n, cin, h, wdt = x_nchw.shape                   # per-channel bias cancels.
    cout = w.shape[0]
    h2, w2 = 2 * h, 2 * wdt

    x = jnp.transpose(x_nchw, (0, 2, 3, 1)).astype(jnp.float32)   # NHWC

    # --- W-direction bilinear x2 (fixed taps 0.25/0.75, no gather), JAX glue.
    # TODO(synk): W-direction upsample + halo row pre-tiling stay in XLA glue;
    # only ~2x the small pre-upsample tensor touches HBM (not the 4x image).
    xp = jnp.pad(x, ((0, 0), (0, 0), (1, 1), (0, 0)), mode="edge")
    c0 = xp[:, :, 0:wdt, :]
    c1 = xp[:, :, 1:wdt + 1, :]
    c2 = xp[:, :, 2:wdt + 2, :]
    weven = 0.25 * c0 + 0.75 * c1
    wodd = 0.75 * c1 + 0.25 * c2
    xw = jnp.stack([weven, wodd], axis=3).reshape(n, h, w2, cin)

    # --- H-direction: edge-pad, pre-tile rows with a 2-row halo so the grid
    #     gets clean non-overlapping blocks.
    th = _pick_tile_rows(h2, w2)       # upsampled output rows per grid step
    th2 = th // 2                      # original-resolution rows per step
    nr = h2 // th
    xh = jnp.pad(xw, ((0, 0), (1, 1), (0, 0), (0, 0)), mode="edge")
    xt = jnp.stack([xh[:, r * th2:r * th2 + th2 + 2] for r in range(nr)],
                   axis=1)             # (n, nr, th2+2, w2, cin)

    # conv weights -> (Cout, 9*Cin), flat index (dy*3 + dx)*Cin + ci
    w9t = jnp.transpose(w, (0, 2, 3, 1)).reshape(cout, 9 * cin).astype(jnp.float32)

    hw2 = h2 * w2
    mblk = th * w2
    kern = functools.partial(_upconv_kernel, th=th, w2=w2, cin=cin)
    y, stats = pl.pallas_call(
        kern,
        out_shape=(jax.ShapeDtypeStruct((n, cout, hw2), jnp.float32),
                   jax.ShapeDtypeStruct((n, nr, cout, 2), jnp.float32)),
        grid_spec=pltpu.PrefetchScalarGridSpec(
            num_scalar_prefetch=0,
            grid=(n, nr),
            in_specs=[
                pl.BlockSpec((None, None, th2 + 2, w2, cin),
                             lambda i, r: (i, r, 0, 0, 0)),
                pl.BlockSpec((cout, 9 * cin), lambda i, r: (0, 0)),
            ],
            out_specs=(
                pl.BlockSpec((None, cout, mblk), lambda i, r: (i, 0, r)),
                pl.BlockSpec((None, None, cout, 2), lambda i, r: (i, r, 0, 0)),
            ),
        ),
        compiler_params=pltpu.CompilerParams(
            dimension_semantics=("parallel", "parallel"),
            vmem_limit_bytes=32 * 1024 * 1024),
    )(xt, w9t)

    # --- BN batch statistics (training mode, biased variance) from the tiny
    #     per-block partials; this cross-grid reduction stays in JAX.
    cnt = jnp.float32(n * hw2)
    sums = jnp.sum(stats, axis=(0, 1))                # (cout, 2)
    mean = sums[:, 0] / cnt
    var = sums[:, 1] / cnt - mean * mean
    scale = gamma.astype(jnp.float32) / jnp.sqrt(var + eps)
    shift = beta.astype(jnp.float32) - mean * scale

    out_nc = pl.pallas_call(
        _bn_relu_kernel,
        out_shape=jax.ShapeDtypeStruct((n, cout, hw2), jnp.float32),
        grid_spec=pltpu.PrefetchScalarGridSpec(
            num_scalar_prefetch=0,
            grid=(n, nr),
            in_specs=[
                pl.BlockSpec((None, cout, mblk), lambda i, r: (i, 0, r)),
                pl.BlockSpec((cout, 1), lambda i, r: (0, 0)),
                pl.BlockSpec((cout, 1), lambda i, r: (0, 0)),
            ],
            out_specs=pl.BlockSpec((None, cout, mblk), lambda i, r: (i, 0, r)),
        ),
        compiler_params=pltpu.CompilerParams(
            dimension_semantics=("parallel", "parallel"),
            vmem_limit_bytes=32 * 1024 * 1024),
    )(y, scale.reshape(cout, 1), shift.reshape(cout, 1))

    return out_nc.reshape(n, cout, h2, w2)            # already NCHW


# ---------------------------------------------------------------------------
# Pure-JAX reference (gather-based upsample + lax.conv + BN + ReLU, with bias).
# ---------------------------------------------------------------------------
def _upsample_bilinear_x2_ref(x):
    N, H, W, C = x.shape

    def idx_weights(in_size):
        o = jnp.arange(2 * in_size, dtype=jnp.float32)
        src = (o + 0.5) * 0.5 - 0.5
        src = jnp.maximum(src, 0.0)
        i0 = jnp.minimum(jnp.floor(src).astype(jnp.int32), in_size - 1)
        i1 = jnp.minimum(i0 + 1, in_size - 1)
        w1 = src - i0.astype(jnp.float32)
        return i0, i1, 1.0 - w1, w1

    h0, h1, wh0, wh1 = idx_weights(H)
    w0i, w1i, ww0, ww1 = idx_weights(W)
    xh = (x[:, h0] * wh0[None, :, None, None] + x[:, h1] * wh1[None, :, None, None])
    return (xh[:, :, w0i] * ww0[None, None, :, None]
            + xh[:, :, w1i] * ww1[None, None, :, None])


def reference_forward(x_nchw, params, *, eps=1e-5):
    w, b = params["w"], params["b"]
    gamma, beta = params["gamma"], params["beta"]
    x = jnp.transpose(x_nchw, (0, 2, 3, 1))
    x = _upsample_bilinear_x2_ref(x)
    y = jax.lax.conv_general_dilated(
        x, jnp.transpose(w, (2, 3, 1, 0)),
        window_strides=(1, 1), padding=((1, 1), (1, 1)),
        dimension_numbers=("NHWC", "HWIO", "NHWC"),
        preferred_element_type=jnp.float32)
    y = y + b[None, None, None, :]
    mean = jnp.mean(y, axis=(0, 1, 2))
    var = jnp.var(y, axis=(0, 1, 2))
    out = jnp.maximum((y - mean) / jnp.sqrt(var + eps) * gamma + beta, 0.0)
    return jnp.transpose(out, (0, 3, 1, 2))


if __name__ == "__main__":
    key = jax.random.PRNGKey(0)
    k_x, k_w, k_b, k_g, k_bt = jax.random.split(key, 5)

    N, Cin, H, W = 2, 4, 16, 16
    Cout = 8

    x = jax.random.normal(k_x, (N, Cin, H, W), dtype=jnp.float32)
    params = {
        "w": 0.1 * jax.random.normal(k_w, (Cout, Cin, 3, 3), dtype=jnp.float32),
        "b": 0.1 * jax.random.normal(k_b, (Cout,), dtype=jnp.float32),
        "gamma": 1.0 + 0.1 * jax.random.normal(k_g, (Cout,), dtype=jnp.float32),
        "beta": 0.1 * jax.random.normal(k_bt, (Cout,), dtype=jnp.float32),
    }

    fwd = jax.jit(up_conv_block_forward)
    out = jax.block_until_ready(fwd(x, params))
    assert out.shape == (N, Cout, 2 * H, 2 * W), out.shape

    ref = jax.block_until_ready(reference_forward(x, params))
    max_err = float(jnp.max(jnp.abs(out - ref)))
    assert jnp.allclose(out, ref, atol=2e-2, rtol=2e-2), max_err

    print("KERNEL_OK")
</pallas_src>

<mosaic_0001>
module attributes {stable_mosaic.version = 11 : i64} {
  func.func @_upconv_kernel(%arg0: i32, %arg1: i32, %arg2: memref<1x1x6x32x4xf32, #tpu.memory_space<vmem>>, %arg3: memref<8x36xf32, #tpu.memory_space<vmem>>, %arg4: memref<1x8x256xf32, #tpu.memory_space<vmem>>, %arg5: memref<1x1x8x2xf32, #tpu.memory_space<vmem>>) attributes {dimension_semantics = [#tpu.dimension_semantics<parallel>, #tpu.dimension_semantics<parallel>], iteration_bounds = array<i64: 2, 4>, scalar_prefetch = 0 : i64, scratch_operands = 0 : i64, tpu.core_type = #tpu.core_type<tc>, window_params = [{transform_indices = @transform_0, window_bounds = array<i64: 1, 1, 6, 32, 4>}, {pipeline_mode = #tpu.pipeline_mode<synchronous>, transform_indices = @transform_1, window_bounds = array<i64: 8, 36>}, {transform_indices = @transform_2, window_bounds = array<i64: 1, 8, 256>}, {transform_indices = @transform_3, window_bounds = array<i64: 1, 1, 8, 2>}]} {
    %c0 = arith.constant 0 : index
    %c0_0 = arith.constant 0 : index
    %c0_1 = arith.constant 0 : index
    %c0_2 = arith.constant 0 : index
    %c0_3 = arith.constant 0 : index
    %0 = vector.load %arg2[%c0, %c0_0, %c0_1, %c0_2, %c0_3] : memref<1x1x6x32x4xf32, #tpu.memory_space<vmem>>, vector<1x1x6x32x4xf32>
    %1 = vector.shape_cast %0 : vector<1x1x6x32x4xf32> to vector<6x32x4xf32>
    %2 = vector.extract_strided_slice %1 {offsets = [0, 0, 0], sizes = [5, 32, 4], strides = [1, 1, 1]} : vector<6x32x4xf32> to vector<5x32x4xf32>
    %3 = vector.extract_strided_slice %1 {offsets = [1, 0, 0], sizes = [5, 32, 4], strides = [1, 1, 1]} : vector<6x32x4xf32> to vector<5x32x4xf32>
    %cst = arith.constant 2.500000e-01 : f32
    %4 = vector.broadcast %cst : f32 to vector<5x32x4xf32>
    %5 = arith.mulf %4, %2 : vector<5x32x4xf32>
    %cst_4 = arith.constant 7.500000e-01 : f32
    %6 = vector.broadcast %cst_4 : f32 to vector<5x32x4xf32>
    %7 = arith.mulf %6, %3 : vector<5x32x4xf32>
    %8 = arith.addf %5, %7 : vector<5x32x4xf32>
    %cst_5 = arith.constant 7.500000e-01 : f32
    %9 = vector.broadcast %cst_5 : f32 to vector<5x32x4xf32>
    %10 = arith.mulf %9, %2 : vector<5x32x4xf32>
    %cst_6 = arith.constant 2.500000e-01 : f32
    %11 = vector.broadcast %cst_6 : f32 to vector<5x32x4xf32>
    %12 = arith.mulf %11, %3 : vector<5x32x4xf32>
    %13 = arith.addf %10, %12 : vector<5x32x4xf32>
    %14 = vector.shape_cast %13 : vector<5x32x4xf32> to vector<5x1x32x4xf32>
    %15 = vector.shape_cast %8 : vector<5x32x4xf32> to vector<5x1x32x4xf32>
    %16 = tpu.concatenate %14, %15 in 1 : vector<5x1x32x4xf32>, vector<5x1x32x4xf32> -> vector<5x2x32x4xf32>
    %17 = vector.shape_cast %16 : vector<5x2x32x4xf32> to vector<10x32x4xf32>
    %18 = tpu.iota {dimensions = array<i32: 0>} : vector<10x1x1xi32>
    %c0_i32 = arith.constant 0 : i32
    %19 = arith.cmpi eq, %arg1, %c0_i32 : i32
    %c0_i32_7 = arith.constant 0 : i32
    %20 = vector.broadcast %c0_i32_7 : i32 to vector<10x1x1xi32>
    %21 = arith.cmpi eq, %18, %20 : vector<10x1x1xi32>
    %22 = vector.broadcast %19 : i1 to vector<10x1x1xi1>
    %23 = arith.andi %22, %21 : vector<10x1x1xi1>
    %c3_i32 = arith.constant 3 : i32
    %24 = arith.cmpi eq, %arg1, %c3_i32 : i32
    %c9_i32 = arith.constant 9 : i32
    %25 = vector.broadcast %c9_i32 : i32 to vector<10x1x1xi32>
    %26 = arith.cmpi eq, %18, %25 : vector<10x1x1xi32>
    %27 = vector.broadcast %24 : i1 to vector<10x1x1xi1>
    %28 = arith.andi %27, %26 : vector<10x1x1xi1>
    %29 = arith.ori %23, %28 : vector<10x1x1xi1>
    %cst_8 = arith.constant 0.000000e+00 : f32
    %30 = vector.shape_cast %29 : vector<10x1x1xi1> to vector<10x1x1xi1>
    %31 = vector.broadcast %30 : vector<10x1x1xi1> to vector<10x32x4xi1>
    %32 = vector.broadcast %cst_8 : f32 to vector<10x32x4xf32>
    %33 = arith.select %31, %32, %17 : vector<10x32x4xi1>, vector<10x32x4xf32>
    %cst_9 = arith.constant 0.000000e+00 : f32
    %34 = vector.broadcast %cst_9 : f32 to vector<10x1x4xf32>
    %35 = tpu.concatenate %34, %33, %34 in 1 : vector<10x1x4xf32>, vector<10x32x4xf32>, vector<10x1x4xf32> -> vector<10x34x4xf32>
    %36 = vector.extract_strided_slice %35 {offsets = [0, 0, 0], sizes = [8, 32, 4], strides = [1, 1, 1]} : vector<10x34x4xf32> to vector<8x32x4xf32>
    %37 = vector.extract_strided_slice %35 {offsets = [0, 1, 0], sizes = [8, 32, 4], strides = [1, 1, 1]} : vector<10x34x4xf32> to vector<8x32x4xf32>
    %38 = vector.extract_strided_slice %35 {offsets = [0, 2, 0], sizes = [8, 32, 4], strides = [1, 1, 1]} : vector<10x34x4xf32> to vector<8x32x4xf32>
    %39 = vector.extract_strided_slice %35 {offsets = [1, 0, 0], sizes = [8, 32, 4], strides = [1, 1, 1]} : vector<10x34x4xf32> to vector<8x32x4xf32>
    %40 = vector.extract_strided_slice %35 {offsets = [1, 1, 0], sizes = [8, 32, 4], strides = [1, 1, 1]} : vector<10x34x4xf32> to vector<8x32x4xf32>
    %41 = vector.extract_strided_slice %35 {offsets = [1, 2, 0], sizes = [8, 32, 4], strides = [1, 1, 1]} : vector<10x34x4xf32> to vector<8x32x4xf32>
    %42 = vector.extract_strided_slice %35 {offsets = [2, 0, 0], sizes = [8, 32, 4], strides = [1, 1, 1]} : vector<10x34x4xf32> to vector<8x32x4xf32>
    %43 = vector.extract_strided_slice %35 {offsets = [2, 1, 0], sizes = [8, 32, 4], strides = [1, 1, 1]} : vector<10x34x4xf32> to vector<8x32x4xf32>
    %44 = vector.extract_strided_slice %35 {offsets = [2, 2, 0], sizes = [8, 32, 4], strides = [1, 1, 1]} : vector<10x34x4xf32> to vector<8x32x4xf32>
    %45 = tpu.concatenate %36, %37, %38, %39, %40, %41, %42, %43, %44 in 2 : vector<8x32x4xf32>, vector<8x32x4xf32>, vector<8x32x4xf32>, vector<8x32x4xf32>, vector<8x32x4xf32>, vector<8x32x4xf32>, vector<8x32x4xf32>, vector<8x32x4xf32>, vector<8x32x4xf32> -> vector<8x32x36xf32>
    %46 = vector.shape_cast %45 : vector<8x32x36xf32> to vector<256x36xf32>
    %c0_10 = arith.constant 0 : index
    %c0_11 = arith.constant 0 : index
    %47 = vector.load %arg3[%c0_10, %c0_11] : memref<8x36xf32, #tpu.memory_space<vmem>>, vector<8x36xf32>
    %cst_12 = arith.constant dense<0.000000e+00> : vector<8x256xf32>
    %48 = tpu.matmul %47, %46, %cst_12 {dimension_numbers = #tpu.dot_dimension_numbers<[1], [1], [0], [0], [0, 0, 1, 0], [], []>} : vector<8x36xf32>, vector<256x36xf32>, vector<8x256xf32> -> vector<8x256xf32>
    %c0_13 = arith.constant 0 : index
    %c0_14 = arith.constant 0 : index
    %c0_15 = arith.constant 0 : index
    %49 = vector.load %arg4[%c0_13, %c0_14, %c0_15] : memref<1x8x256xf32, #tpu.memory_space<vmem>>, vector<1x8x256xf32>
    %50 = vector.shape_cast %49 : vector<1x8x256xf32> to vector<8x256xf32>
    %51 = vector.shape_cast %48 : vector<8x256xf32> to vector<1x8x256xf32>
    tpu.vector_store %arg4[%c0_13, %c0_14, %c0_15], %51 {strides = array<i32>} : memref<1x8x256xf32, #tpu.memory_space<vmem>>, vector<1x8x256xf32>,
    %cst_16 = arith.constant dense<0.000000e+00> : vector<8xf32>
    %52 = vector.multi_reduction <add>, %48, %cst_16 [1] : vector<8x256xf32> to vector<8xf32>
    %53 = vector.shape_cast %52 : vector<8xf32> to vector<8x1xf32>
    %54 = arith.mulf %48, %48 : vector<8x256xf32>
    %cst_17 = arith.constant dense<0.000000e+00> : vector<8xf32>
    %55 = vector.multi_reduction <add>, %54, %cst_17 [1] : vector<8x256xf32> to vector<8xf32>
    %56 = vector.shape_cast %55 : vector<8xf32> to vector<8x1xf32>
    %57 = tpu.concatenate %53, %56 in 1 : vector<8x1xf32>, vector<8x1xf32> -> vector<8x2xf32>
    %c0_18 = arith.constant 0 : index
    %c0_19 = arith.constant 0 : index
    %c0_20 = arith.constant 0 : index
    %c0_21 = arith.constant 0 : index
    %58 = vector.load %arg5[%c0_18, %c0_19, %c0_20, %c0_21] : memref<1x1x8x2xf32, #tpu.memory_space<vmem>>, vector<1x1x8x2xf32>
    %59 = vector.shape_cast %58 : vector<1x1x8x2xf32> to vector<8x2xf32>
    %60 = vector.shape_cast %57 : vector<8x2xf32> to vector<1x1x8x2xf32>
    tpu.vector_store %arg5[%c0_18, %c0_19, %c0_20, %c0_21], %60 {strides = array<i32>} : memref<1x1x8x2xf32, #tpu.memory_space<vmem>>, vector<1x1x8x2xf32>,
    return
  }
  func.func @transform_0(%arg0: i32, %arg1: i32) -> (i32, i32, i32, i32, i32) {
    %c0_i32 = arith.constant 0 : i32
    %c0_i32_0 = arith.constant 0 : i32
    %c0_i32_1 = arith.constant 0 : i32
    %c0_i32_2 = arith.constant 0 : i32
    return %arg0, %arg1, %c0_i32, %c0_i32_0, %c0_i32_1 : i32, i32, i32, i32, i32
  }
  func.func @transform_1(%arg0: i32, %arg1: i32) -> (i32, i32) {
    %c0_i32 = arith.constant 0 : i32
    %c0_i32_0 = arith.constant 0 : i32
    %c0_i32_1 = arith.constant 0 : i32
    return %c0_i32, %c0_i32_0 : i32, i32
  }
  func.func @transform_2(%arg0: i32, %arg1: i32) -> (i32, i32, i32) {
    %c0_i32 = arith.constant 0 : i32
    %c0_i32_0 = arith.constant 0 : i32
    return %arg0, %c0_i32, %arg1 : i32, i32, i32
  }
  func.func @transform_3(%arg0: i32, %arg1: i32) -> (i32, i32, i32, i32) {
    %c0_i32 = arith.constant 0 : i32
    %c0_i32_0 = arith.constant 0 : i32
    %c0_i32_1 = arith.constant 0 : i32
    return %arg0, %arg1, %c0_i32, %c0_i32_0 : i32, i32, i32, i32
  }
}

module attributes {stable_mosaic.version = 11 : i64} {
  func.func @_bn_relu_kernel(%arg0: i32, %arg1: i32, %arg2: memref<1x8x256xf32, #tpu.memory_space<vmem>>, %arg3: memref<8x1xf32, #tpu.memory_space<vmem>>, %arg4: memref<8x1xf32, #tpu.memory_space<vmem>>, %arg5: memref<1x8x256xf32, #tpu.memory_space<vmem>>) attributes {dimension_semantics = [#tpu.dimension_semantics<parallel>, #tpu.dimension_semantics<parallel>], iteration_bounds = array<i64: 2, 4>, scalar_prefetch = 0 : i64, scratch_operands = 0 : i64, tpu.core_type = #tpu.core_type<tc>, window_params = [{transform_indices = @transform_0, window_bounds = array<i64: 1, 8, 256>}, {pipeline_mode = #tpu.pipeline_mode<synchronous>, transform_indices = @transform_1, window_bounds = array<i64: 8, 1>}, {pipeline_mode = #tpu.pipeline_mode<synchronous>, transform_indices = @transform_2, window_bounds = array<i64: 8, 1>}, {transform_indices = @transform_3, window_bounds = array<i64: 1, 8, 256>}]} {
    %c0 = arith.constant 0 : index
    %c0_0 = arith.constant 0 : index
    %c0_1 = arith.constant 0 : index
    %0 = vector.load %arg2[%c0, %c0_0, %c0_1] : memref<1x8x256xf32, #tpu.memory_space<vmem>>, vector<1x8x256xf32>
    %1 = vector.shape_cast %0 : vector<1x8x256xf32> to vector<8x256xf32>
    %c0_2 = arith.constant 0 : index
    %c0_3 = arith.constant 0 : index
    %2 = vector.load %arg3[%c0_2, %c0_3] : memref<8x1xf32, #tpu.memory_space<vmem>>, vector<8x1xf32>
    %3 = vector.broadcast %2 : vector<8x1xf32> to vector<8x256xf32>
    %4 = arith.mulf %1, %3 : vector<8x256xf32>
    %c0_4 = arith.constant 0 : index
    %c0_5 = arith.constant 0 : index
    %5 = vector.load %arg4[%c0_4, %c0_5] : memref<8x1xf32, #tpu.memory_space<vmem>>, vector<8x1xf32>
    %6 = vector.broadcast %5 : vector<8x1xf32> to vector<8x256xf32>
    %7 = arith.addf %4, %6 : vector<8x256xf32>
    %cst = arith.constant 0.000000e+00 : f32
    %8 = vector.broadcast %cst : f32 to vector<8x256xf32>
    %9 = arith.maximumf %7, %8 : vector<8x256xf32>
    %c0_6 = arith.constant 0 : index
    %c0_7 = arith.constant 0 : index
    %c0_8 = arith.constant 0 : index
    %10 = vector.load %arg5[%c0_6, %c0_7, %c0_8] : memref<1x8x256xf32, #tpu.memory_space<vmem>>, vector<1x8x256xf32>
    %11 = vector.shape_cast %10 : vector<1x8x256xf32> to vector<8x256xf32>
    %12 = vector.shape_cast %9 : vector<8x256xf32> to vector<1x8x256xf32>
    tpu.vector_store %arg5[%c0_6, %c0_7, %c0_8], %12 {strides = array<i32>} : memref<1x8x256xf32, #tpu.memory_space<vmem>>, vector<1x8x256xf32>,
    return
  }
  func.func @transform_0(%arg0: i32, %arg1: i32) -> (i32, i32, i32) {
    %c0_i32 = arith.constant 0 : i32
    %c0_i32_0 = arith.constant 0 : i32
    return %arg0, %c0_i32, %arg1 : i32, i32, i32
  }
  func.func @transform_1(%arg0: i32, %arg1: i32) -> (i32, i32) {
    %c0_i32 = arith.constant 0 : i32
    %c0_i32_0 = arith.constant 0 : i32
    %c0_i32_1 = arith.constant 0 : i32
    return %c0_i32, %c0_i32_0 : i32, i32
  }
  func.func @transform_2(%arg0: i32, %arg1: i32) -> (i32, i32) {
    %c0_i32 = arith.constant 0 : i32
    %c0_i32_0 = arith.constant 0 : i32
    %c0_i32_1 = arith.constant 0 : i32
    return %c0_i32, %c0_i32_0 : i32, i32
  }
  func.func @transform_3(%arg0: i32, %arg1: i32) -> (i32, i32, i32) {
    %c0_i32 = arith.constant 0 : i32
    %c0_i32_0 = arith.constant 0 : i32
    return %arg0, %c0_i32, %arg1 : i32, i32, i32
  }
}

</mosaic_0001>

<llo_original>
// kernel: up_conv_block_forward.3
$region0: #{up_conv_block_forward.3}
  #allocation0 [shape = 'u32[]', space=smem, size = 0x4, offset = 0x4, fixed_abs, tag = 'smem constant byte address 0x4 - core index']
  #allocation1 [shape = 'u32[72,128]{1,0:T(1,128)}', space=vmem, size = 0x9000, scoped, tag = 'internal scratch']
  %s0 = inlined_call_operand.vmem [shape: f32[2,8,1024], index: 0, kind: input, shape index: {}]
  %s1 = inlined_call_operand.vmem [shape: f32[8,1], index: 1, kind: input, shape index: {}]
  %s2 = inlined_call_operand.vmem [shape: f32[8,1], index: 2, kind: input, shape index: {}]
  %s3 = inlined_call_operand.vmem [shape: f32[2,8,1024], index: 3, kind: output, shape index: {}]
  %s4 = sld [smem:[#allocation0]]
  $region45: #{up_conv_block_forward.3} parent=0
    _
  %s6 = ssub.s32 1, %s4
  %s7 = scalar_select 0, %s6, %s4
  loop: start=0, step=1, limit=10
  $region2: #{up_conv_block_forward.3} parent=0 // loop_pre_header
    _
  $region3: #{up_conv_block_forward.3} parent=0 // loop_header
    %s9 = sphi 0, %s13
    %p10 = scmp.ge.s32.totalorder %s9, 10
    %s16 = sphi 0, %s28
    %s17 = sphi 0, %s24
    %s18 = sphi 0, %s16
    %s19 = sphi 0, %s17
    %s20 = sphi 0, %s18
    %s21 = sphi 0, %s19
    %s33 = sphi 0, %s35
    %s36 = sphi 0, %s33
    %s37 = sphi 0, %s36
    %s53 = sphi 0, %s37
    %s57 = sphi 0, %s57
    %s59 = sphi 0, %s57
    %s60 = sphi 0, %s59
    %s74 = sphi 0, %s60
    %s78 = sphi 0, %s78
    %s80 = sphi 0, %s78
    %s81 = sphi 0, %s80
    %s95 = sphi 0, %s81
    %s103 = sphi 0, %s105
    %s106 = sphi 0, %s103
    %s107 = sphi 0, %s106
    %s123 = sphi 0, %s107
  $region4: #{up_conv_block_forward.3} parent=0 // loop_header_branch
    %12 = sbr.rel (%p10) target = $region8
  $region5: #{up_conv_block_forward.3} parent=0 // loop_body
    %s14 = ssub.s32 %s9, 1
    %s15 = ssub.s32 %s9, 2
    %s22 = sadd.s32 1, %s17
    %p23 = scmp.ge.s32.totalorder %s22, 4
    %s24 = scalar_select %p23, 0, %s22
    %s25 = sadd.s32 1, %s16
    %s26 = scalar_select %p23, %s25, %s16
    %p27 = scmp.ge.s32.totalorder %s26, 2
    %s28 = scalar_select %p27, 0, %s26
    %s29 = ssub.s32 %s16, %s28
    %s30 = ssub.s32 %s17, %s24
    %s31 = sor.u32 %s29, %s30
    %p32 = scmp.eq.s32.totalorder %s31, 0
    %s34 = sadd.s32 %s33, 1
    %s35 = scalar_select %p32, %s33, %s34
    %p38 = pneg %p32
    %p39 = scmp.eq.s32.totalorder %s9, 7
    %p40 = por %p38, %p39
    %p41 = scmp.ne.s32.totalorder %s33, %s36
    %p42 = scmp.eq.s32.totalorder %s9, 0
    %p43 = por %p41, %p42
    %p44 = scmp.ne.s32.totalorder %s33, %s36
    %p45 = scmp.eq.s32.totalorder %s14, 7
    %p46 = por %p44, %p45
    %p47 = scmp.ne.s32.totalorder %s36, %s37
    %p48 = scmp.eq.s32.totalorder %s14, 0
    %p49 = por %p47, %p48
    %p50 = scmp.ne.s32.totalorder %s36, %s37
    %p51 = scmp.eq.s32.totalorder %s15, 7
    %p52 = por %p50, %p51
    %p54 = scmp.ne.s32.totalorder %s37, %s53
    %p55 = scmp.eq.s32.totalorder %s15, 0
    %p56 = por %p54, %p55
    %s58 = sadd.s32 %s57, 1
    %p61 = scmp.eq.s32.totalorder %s9, 7
    %p62 = scmp.ne.s32.totalorder %s57, %s59
    %p63 = scmp.eq.s32.totalorder %s9, 0
    %p64 = por %p62, %p63
    %p65 = scmp.ne.s32.totalorder %s57, %s59
    %p66 = scmp.eq.s32.totalorder %s14, 7
    %p67 = por %p65, %p66
    %p68 = scmp.ne.s32.totalorder %s59, %s60
    %p69 = scmp.eq.s32.totalorder %s14, 0
    %p70 = por %p68, %p69
    %p71 = scmp.ne.s32.totalorder %s59, %s60
    %p72 = scmp.eq.s32.totalorder %s15, 7
    %p73 = por %p71, %p72
    %p75 = scmp.ne.s32.totalorder %s60, %s74
    %p76 = scmp.eq.s32.totalorder %s15, 0
    %p77 = por %p75, %p76
    %s79 = sadd.s32 %s78, 1
    %p82 = scmp.eq.s32.totalorder %s9, 7
    %p83 = scmp.ne.s32.totalorder %s78, %s80
    %p84 = scmp.eq.s32.totalorder %s9, 0
    %p85 = por %p83, %p84
    %p86 = scmp.ne.s32.totalorder %s78, %s80
    %p87 = scmp.eq.s32.totalorder %s14, 7
    %p88 = por %p86, %p87
    %p89 = scmp.ne.s32.totalorder %s80, %s81
    %p90 = scmp.eq.s32.totalorder %s14, 0
    %p91 = por %p89, %p90
    %p92 = scmp.ne.s32.totalorder %s80, %s81
    %p93 = scmp.eq.s32.totalorder %s15, 7
    %p94 = por %p92, %p93
    %p96 = scmp.ne.s32.totalorder %s81, %s95
    %p97 = scmp.eq.s32.totalorder %s15, 0
    %p98 = por %p96, %p97
    %s99 = ssub.s32 %s16, %s28
    %s100 = ssub.s32 %s17, %s24
    %s101 = sor.u32 %s99, %s100
    %p102 = scmp.eq.s32.totalorder %s101, 0
    %s104 = sadd.s32 %s103, 1
    %s105 = scalar_select %p102, %s103, %s104
    %p108 = pneg %p102
    %p109 = scmp.eq.s32.totalorder %s9, 7
    %p110 = por %p108, %p109
    %p111 = scmp.ne.s32.totalorder %s103, %s106
    %p112 = scmp.eq.s32.totalorder %s9, 0
    %p113 = por %p111, %p112
    %p114 = scmp.ne.s32.totalorder %s103, %s106
    %p115 = scmp.eq.s32.totalorder %s14, 7
    %p116 = por %p114, %p115
    %p117 = scmp.ne.s32.totalorder %s106, %s107
    %p118 = scmp.eq.s32.totalorder %s14, 0
    %p119 = por %p117, %p118
    %p120 = scmp.ne.s32.totalorder %s106, %s107
    %p121 = scmp.eq.s32.totalorder %s15, 7
    %p122 = por %p120, %p121
    %p124 = scmp.ne.s32.totalorder %s107, %s123
    %p125 = scmp.eq.s32.totalorder %s15, 0
    %p126 = por %p124, %p125
    %p127 = scmp.le.s32.totalorder 1, %s9
    %p128 = scmp.lt.s32.totalorder %s9, 9
    %p129 = pnand %p127, %p128
    %p130 = pneg %p129
    // Predicated region
    $region9: #{up_conv_block_forward.3} parent=5 // pred_check
      _
    $region10: #{up_conv_block_forward.3} parent=5 // pred_check_branch
      %132 = sbr.rel (%p129) target = $region12
    $region11: #{up_conv_block_forward.3} parent=5 // pred_region
      %s133 = ssub.s32 %s9, 1
      // Predicated region
      $region13: #{up_conv_block_forward.3} parent=11 // pred_check
        %p134 = pneg %p70
      $region14: #{up_conv_block_forward.3} parent=11 // pred_check_branch
        %136 = sbr.rel (%p134) target = $region16
      $region15: #{up_conv_block_forward.3} parent=11 // pred_region
        _
      $region16: #{up_conv_block_forward.3} parent=11 // pred_fallthru
        _
      // Predicated region
      $region17: #{up_conv_block_forward.3} parent=11 // pred_check
        %p137 = pneg %p91
      $region18: #{up_conv_block_forward.3} parent=11 // pred_check_branch
        %139 = sbr.rel (%p137) target = $region20
      $region19: #{up_conv_block_forward.3} parent=11 // pred_region
        _
      $region20: #{up_conv_block_forward.3} parent=11 // pred_fallthru
        _
    $region12: #{up_conv_block_forward.3} parent=5 // pred_fallthru
      _
    %p140 = scmp.lt.s32.totalorder %s9, 8
    // Predicated region
    $region21: #{up_conv_block_forward.3} parent=5 // pred_check
      %p141 = pneg %p140
    $region22: #{up_conv_block_forward.3} parent=5 // pred_check_branch
      %143 = sbr.rel (%p141) target = $region24
    $region23: #{up_conv_block_forward.3} parent=5 // pred_region
      // Predicated region
      $region25: #{up_conv_block_forward.3} parent=23 // pred_check
        %p144 = pneg %p43
      $region26: #{up_conv_block_forward.3} parent=23 // pred_check_branch
        %146 = sbr.rel (%p144) target = $region28
      $region27: #{up_conv_block_forward.3} parent=23 // pred_region
        %s147 = smul.u32 2, %s17
        %p148 = scmp.lt.s32.totalorder %s16, 1
        %s149 = scalar_select %p148, %s16, 1
        %p150 = scmp.lt.s32.totalorder %s147, 7
        %s151 = scalar_select %p150, %s147, 7
        %s152 = smul.addr %s149, 8
        %s153 = sadd.s32 %s151, %s152
        %s154 = smul.addr %s153, 8
        %s155 = scalar_lea.vmem %s0, %s154
        %s156 = smul.u32 2, %s17
      $region28: #{up_conv_block_forward.3} parent=23 // pred_fallthru
        _
    $region24: #{up_conv_block_forward.3} parent=5 // pred_fallthru
      _
    %p157 = scmp.le.s32.totalorder 1, %s9
    %p158 = scmp.lt.s32.totalorder %s9, 9
    %p159 = pnand %p157, %p158
    %p160 = pneg %p159
    // Predicated region
    $region29: #{up_conv_block_forward.3} parent=5 // pred_check
      _
    $region30: #{up_conv_block_forward.3} parent=5 // pred_check_branch
      %162 = sbr.rel (%p159) target = $region32
    $region31: #{up_conv_block_forward.3} parent=5 // pred_region
      %s163 = ssub.s32 %s9, 1
      %s164 = smul.u32 2, %s19
      %p165 = scmp.lt.s32.totalorder %s18, 1
      %s166 = scalar_select %p165, %s18, 1
      %p167 = scmp.lt.s32.totalorder %s164, 7
      %s168 = scalar_select %p167, %s164, 7
      %s169 = smul.addr %s166, 8
      %s170 = sadd.s32 %s168, %s169
      %s171 = smul.addr %s170, 8
      %s172 = scalar_lea.vmem %s0, %s171
      %p173 = pneg %p49
      %p174 = pneg %p46
      %p175 = pneg %p70
      %p176 = pneg %p67
      %p177 = pneg %p91
      %p178 = pneg %p88
      %p179 = pneg %p119
      %p180 = pneg %p116
      %s181 = smul.u32 2, %s19
      %p182 = scmp.lt.s32.totalorder %s18, 1
      %s183 = scalar_select %p182, %s18, 1
      %p184 = scmp.lt.s32.totalorder %s181, 7
      %s185 = scalar_select %p184, %s181, 7
      %s186 = smul.addr %s183, 8
      %s187 = sadd.s32 %s185, %s186
      %s188 = smul.addr %s187, 8
      %s189 = scalar_lea.vmem %s3, %s188
      %s190 = smul.u32 2, %s19
      %p191 = scmp.lt.s32.totalorder %s18, 1
      %s192 = scalar_select %p191, %s18, 1
      %p193 = scmp.lt.s32.totalorder %s190, 7
      %s194 = scalar_select %p193, %s190, 7
      %s195 = smul.addr %s192, 8
      %s196 = sadd.s32 %s194, %s195
      %s197 = smul.addr %s196, 8
      %s198 = scalar_lea.vmem %s0, %s197
      %s199 = smul.u32 2, %s19
      %s200 = smul.u32 2, %s19
      %p201 = scmp.lt.s32.totalorder %s18, 1
      %s202 = scalar_select %p201, %s18, 1
      %p203 = scmp.lt.s32.totalorder %s200, 7
      %s204 = scalar_select %p203, %s200, 7
      %s205 = smul.addr %s202, 8
      %s206 = sadd.s32 %s204, %s205
      %s207 = smul.addr %s206, 8
      %s208 = scalar_lea.vmem %s3, %s207
      %s209 = smul.u32 2, %s19
      %v210 = vld [vmem:[%s198] sm:$0xff]
      %v211 = vld [vmem:[%s198 + $0x8] sm:$0xff]
      %v212 = vld [vmem:[%s1] sm:$0xff]
      %214 = vset.pattern.permute.xlu0 0
      %215 = vperm.xlu0 %214, %v212
      %v216 = vpop.permute.xlu0 %215
      %v218 = vmul.f32 %v210, %v216
      %v219 = vmul.f32 %v211, %v216
      %v220 = vld [vmem:[%s2] sm:$0xff]
      %222 = vset.pattern.permute.xlu0 0
      %223 = vperm.xlu0 %222, %v220
      %v224 = vpop.permute.xlu0 %223
      %v226 = vadd.f32 %v218, %v224
      %v227 = vadd.f32 %v219, %v224
      %v228 = vmax.f32 %v226, 0.0
      %v229 = vmax.f32 %v227, 0.0
      %230 = vst [vmem:[%s208] sm:$0xff] %v228
      %231 = vst [vmem:[%s208 + $0x8] sm:$0xff] %v229
      %s232 = smul.u32 2, %s19
      %p233 = scmp.lt.s32.totalorder %s18, 1
      %s234 = scalar_select %p233, %s18, 1
      %p235 = scmp.lt.s32.totalorder %s232, 7
      %s236 = scalar_select %p235, %s232, 7
      %s237 = smul.addr %s234, 8
      %s238 = sadd.s32 %s236, %s237
      %s239 = smul.addr %s238, 8
      %s240 = scalar_lea.vmem %s3, %s239
      // Predicated region
      $region33: #{up_conv_block_forward.3} parent=31 // pred_check
        %p241 = pneg %p116
      $region34: #{up_conv_block_forward.3} parent=31 // pred_check_branch
        %243 = sbr.rel (%p241) target = $region36
      $region35: #{up_conv_block_forward.3} parent=31 // pred_region
        %s244 = smul.u32 2, %s19
      $region36: #{up_conv_block_forward.3} parent=31 // pred_fallthru
        _
    $region32: #{up_conv_block_forward.3} parent=5 // pred_fallthru
      _
    %p245 = scmp.le.s32.totalorder 2, %s9
    // Predicated region
    $region37: #{up_conv_block_forward.3} parent=5 // pred_check
      %p246 = pneg %p245
    $region38: #{up_conv_block_forward.3} parent=5 // pred_check_branch
      %248 = sbr.rel (%p246) target = $region40
    $region39: #{up_conv_block_forward.3} parent=5 // pred_region
      %s249 = ssub.s32 %s9, 2
      // Predicated region
      $region41: #{up_conv_block_forward.3} parent=39 // pred_check
        %p250 = pneg %p122
      $region42: #{up_conv_block_forward.3} parent=39 // pred_check_branch
        %252 = sbr.rel (%p250) target = $region44
      $region43: #{up_conv_block_forward.3} parent=39 // pred_region
        %s253 = smul.u32 2, %s21
        %p254 = scmp.lt.s32.totalorder %s20, 1
        %s255 = scalar_select %p254, %s20, 1
        %p256 = scmp.lt.s32.totalorder %s253, 7
        %s257 = scalar_select %p256, %s253, 7
        %s258 = smul.addr %s255, 8
        %s259 = sadd.s32 %s257, %s258
        %s260 = smul.addr %s259, 8
        %s261 = scalar_lea.vmem %s3, %s260
      $region44: #{up_conv_block_forward.3} parent=39 // pred_fallthru
        _
    $region40: #{up_conv_block_forward.3} parent=5 // pred_fallthru
      _
  $region6: #{up_conv_block_forward.3} parent=0 // loop_footer
    %s13 = sadd.s32 1, %s9
  $region7: #{up_conv_block_forward.3} parent=0 // loop_footer_branch
    %8 = sbr.rel target = $region3
  $region8: #{up_conv_block_forward.3} parent=0 // loop_exit
    _

// kernel: up_conv_block_forward.2
$region0: #{up_conv_block_forward.2}
  #allocation0 [shape = 'u32[]', space=smem, size = 0x4, offset = 0x4, fixed_abs, tag = 'smem constant byte address 0x4 - core index']
  #allocation1 [shape = 'u32[72,128]{1,0:T(1,128)}', space=vmem, size = 0x9000, scoped, tag = 'internal scratch']
  %s0 = inlined_call_operand.vmem [shape: f32[2,4,6,32,4], index: 0, kind: input, shape index: {}]
  %s1 = inlined_call_operand.vmem [shape: f32[8,36], index: 1, kind: input, shape index: {}]
  %s2 = inlined_call_operand.vmem [shape: f32[2,8,1024], index: 2, kind: output, shape index: {0}]
  %s3 = inlined_call_operand.vmem [shape: f32[2,4,8,2], index: 3, kind: output, shape index: {1}]
  %4 = xla_tuple %s2, %s3
  %s5 = sld [smem:[#allocation0]]
  $region49: #{up_conv_block_forward.2} parent=0
    _
  %s7 = ssub.s32 1, %s5
  %s8 = scalar_select 0, %s7, %s5
  loop: start=0, step=1, limit=10
  $region2: #{up_conv_block_forward.2} parent=0 // loop_pre_header
    _
  $region3: #{up_conv_block_forward.2} parent=0 // loop_header
    %s10 = sphi 0, %s14
    %p11 = scmp.ge.s32.totalorder %s10, 10
    %s17 = sphi 0, %s29
    %s18 = sphi 0, %s25
    %s19 = sphi 0, %s17
    %s20 = sphi 0, %s18
    %s21 = sphi 0, %s19
    %s22 = sphi 0, %s20
    %s34 = sphi 0, %s36
    %s37 = sphi 0, %s34
    %s38 = sphi 0, %s37
    %s54 = sphi 0, %s38
    %s58 = sphi 0, %s58
    %s60 = sphi 0, %s58
    %s61 = sphi 0, %s60
    %s75 = sphi 0, %s61
    %s83 = sphi 0, %s85
    %s86 = sphi 0, %s83
    %s87 = sphi 0, %s86
    %s103 = sphi 0, %s87
    %s111 = sphi 0, %s113
    %s114 = sphi 0, %s111
    %s115 = sphi 0, %s114
    %s131 = sphi 0, %s115
  $region4: #{up_conv_block_forward.2} parent=0 // loop_header_branch
    %13 = sbr.rel (%p11) target = $region8
  $region5: #{up_conv_block_forward.2} parent=0 // loop_body
    %s15 = ssub.s32 %s10, 1
    %s16 = ssub.s32 %s10, 2
    %s23 = sadd.s32 1, %s18
    %p24 = scmp.ge.s32.totalorder %s23, 4
    %s25 = scalar_select %p24, 0, %s23
    %s26 = sadd.s32 1, %s17
    %s27 = scalar_select %p24, %s26, %s17
    %p28 = scmp.ge.s32.totalorder %s27, 2
    %s29 = scalar_select %p28, 0, %s27
    %s30 = ssub.s32 %s17, %s29
    %s31 = ssub.s32 %s18, %s25
    %s32 = sor.u32 %s30, %s31
    %p33 = scmp.eq.s32.totalorder %s32, 0
    %s35 = sadd.s32 %s34, 1
    %s36 = scalar_select %p33, %s34, %s35
    %p39 = pneg %p33
    %p40 = scmp.eq.s32.totalorder %s10, 7
    %p41 = por %p39, %p40
    %p42 = scmp.ne.s32.totalorder %s34, %s37
    %p43 = scmp.eq.s32.totalorder %s10, 0
    %p44 = por %p42, %p43
    %p45 = scmp.ne.s32.totalorder %s34, %s37
    %p46 = scmp.eq.s32.totalorder %s15, 7
    %p47 = por %p45, %p46
    %p48 = scmp.ne.s32.totalorder %s37, %s38
    %p49 = scmp.eq.s32.totalorder %s15, 0
    %p50 = por %p48, %p49
    %p51 = scmp.ne.s32.totalorder %s37, %s38
    %p52 = scmp.eq.s32.totalorder %s16, 7
    %p53 = por %p51, %p52
    %p55 = scmp.ne.s32.totalorder %s38, %s54
    %p56 = scmp.eq.s32.totalorder %s16, 0
    %p57 = por %p55, %p56
    %s59 = sadd.s32 %s58, 1
    %p62 = scmp.eq.s32.totalorder %s10, 7
    %p63 = scmp.ne.s32.totalorder %s58, %s60
    %p64 = scmp.eq.s32.totalorder %s10, 0
    %p65 = por %p63, %p64
    %p66 = scmp.ne.s32.totalorder %s58, %s60
    %p67 = scmp.eq.s32.totalorder %s15, 7
    %p68 = por %p66, %p67
    %p69 = scmp.ne.s32.totalorder %s60, %s61
    %p70 = scmp.eq.s32.totalorder %s15, 0
    %p71 = por %p69, %p70
    %p72 = scmp.ne.s32.totalorder %s60, %s61
    %p73 = scmp.eq.s32.totalorder %s16, 7
    %p74 = por %p72, %p73
    %p76 = scmp.ne.s32.totalorder %s61, %s75
    %p77 = scmp.eq.s32.totalorder %s16, 0
    %p78 = por %p76, %p77
    %s79 = ssub.s32 %s17, %s29
    %s80 = ssub.s32 %s18, %s25
    %s81 = sor.u32 %s79, %s80
    %p82 = scmp.eq.s32.totalorder %s81, 0
    %s84 = sadd.s32 %s83, 1
    %s85 = scalar_select %p82, %s83, %s84
    %p88 = pneg %p82
    %p89 = scmp.eq.s32.totalorder %s10, 7
    %p90 = por %p88, %p89
    %p91 = scmp.ne.s32.totalorder %s83, %s86
    %p92 = scmp.eq.s32.totalorder %s10, 0
    %p93 = por %p91, %p92
    %p94 = scmp.ne.s32.totalorder %s83, %s86
    %p95 = scmp.eq.s32.totalorder %s15, 7
    %p96 = por %p94, %p95
    %p97 = scmp.ne.s32.totalorder %s86, %s87
    %p98 = scmp.eq.s32.totalorder %s15, 0
    %p99 = por %p97, %p98
    %p100 = scmp.ne.s32.totalorder %s86, %s87
    %p101 = scmp.eq.s32.totalorder %s16, 7
    %p102 = por %p100, %p101
    %p104 = scmp.ne.s32.totalorder %s87, %s103
    %p105 = scmp.eq.s32.totalorder %s16, 0
    %p106 = por %p104, %p105
    %s107 = ssub.s32 %s17, %s29
    %s108 = ssub.s32 %s18, %s25
    %s109 = sor.u32 %s107, %s108
    %p110 = scmp.eq.s32.totalorder %s109, 0
    %s112 = sadd.s32 %s111, 1
    %s113 = scalar_select %p110, %s111, %s112
    %p116 = pneg %p110
    %p117 = scmp.eq.s32.totalorder %s10, 7
    %p118 = por %p116, %p117
    %p119 = scmp.ne.s32.totalorder %s111, %s114
    %p120 = scmp.eq.s32.totalorder %s10, 0
    %p121 = por %p119, %p120
    %p122 = scmp.ne.s32.totalorder %s111, %s114
    %p123 = scmp.eq.s32.totalorder %s15, 7
    %p124 = por %p122, %p123
    %p125 = scmp.ne.s32.totalorder %s114, %s115
    %p126 = scmp.eq.s32.totalorder %s15, 0
    %p127 = por %p125, %p126
    %p128 = scmp.ne.s32.totalorder %s114, %s115
    %p129 = scmp.eq.s32.totalorder %s16, 7
    %p130 = por %p128, %p129
    %p132 = scmp.ne.s32.totalorder %s115, %s131
    %p133 = scmp.eq.s32.totalorder %s16, 0
    %p134 = por %p132, %p133
    %p135 = scmp.le.s32.totalorder 1, %s10
    %p136 = scmp.lt.s32.totalorder %s10, 9
    %p137 = pnand %p135, %p136
    %p138 = pneg %p137
    // Predicated region
    $region9: #{up_conv_block_forward.2} parent=5 // pred_check
      _
    $region10: #{up_conv_block_forward.2} parent=5 // pred_check_branch
      %140 = sbr.rel (%p137) target = $region12
    $region11: #{up_conv_block_forward.2} parent=5 // pred_region
      %s141 = ssub.s32 %s10, 1
      // Predicated region
      $region13: #{up_conv_block_forward.2} parent=11 // pred_check
        %p142 = pneg %p71
      $region14: #{up_conv_block_forward.2} parent=11 // pred_check_branch
        %144 = sbr.rel (%p142) target = $region16
      $region15: #{up_conv_block_forward.2} parent=11 // pred_region
        _
      $region16: #{up_conv_block_forward.2} parent=11 // pred_fallthru
        _
    $region12: #{up_conv_block_forward.2} parent=5 // pred_fallthru
      _
    %p145 = scmp.lt.s32.totalorder %s10, 8
    // Predicated region
    $region17: #{up_conv_block_forward.2} parent=5 // pred_check
      %p146 = pneg %p145
    $region18: #{up_conv_block_forward.2} parent=5 // pred_check_branch
      %148 = sbr.rel (%p146) target = $region20
    $region19: #{up_conv_block_forward.2} parent=5 // pred_region
      // Predicated region
      $region21: #{up_conv_block_forward.2} parent=19 // pred_check
        %p149 = pneg %p44
      $region22: #{up_conv_block_forward.2} parent=19 // pred_check_branch
        %151 = sbr.rel (%p149) target = $region24
      $region23: #{up_conv_block_forward.2} parent=19 // pred_region
        %p152 = scmp.lt.s32.totalorder %s17, 1
        %s153 = scalar_select %p152, %s17, 1
        %p154 = scmp.lt.s32.totalorder %s18, 3
        %s155 = scalar_select %p154, %s18, 3
        %s156 = smul.addr %s155, 24
        %s157 = smul.addr %s153, 96
        %s158 = sadd.s32 %s156, %s157
        %s159 = smul.addr %s158, 8
        %s160 = scalar_lea.vmem %s0, %s159
      $region24: #{up_conv_block_forward.2} parent=19 // pred_fallthru
        _
    $region20: #{up_conv_block_forward.2} parent=5 // pred_fallthru
      _
    %p161 = scmp.le.s32.totalorder 1, %s10
    %p162 = scmp.lt.s32.totalorder %s10, 9
    %p163 = pnand %p161, %p162
    %p164 = pneg %p163
    // Predicated region
    $region25: #{up_conv_block_forward.2} parent=5 // pred_check
      _
    $region26: #{up_conv_block_forward.2} parent=5 // pred_check_branch
      %166 = sbr.rel (%p163) target = $region28
    $region27: #{up_conv_block_forward.2} parent=5 // pred_region
      %s167 = ssub.s32 %s10, 1
      %p168 = scmp.lt.s32.totalorder %s19, 1
      %s169 = scalar_select %p168, %s19, 1
      %p170 = scmp.lt.s32.totalorder %s20, 3
      %s171 = scalar_select %p170, %s20, 3
      %s172 = smul.addr %s171, 24
      %s173 = smul.addr %s169, 96
      %s174 = sadd.s32 %s172, %s173
      %s175 = smul.addr %s174, 8
      %s176 = scalar_lea.vmem %s0, %s175
      %p177 = pneg %p50
      %p178 = pneg %p47
      %p179 = pneg %p71
      %p180 = pneg %p68
      %p181 = pneg %p99
      %p182 = pneg %p96
      %s183 = smul.u32 2, %s20
      %p184 = scmp.lt.s32.totalorder %s19, 1
      %s185 = scalar_select %p184, %s19, 1
      %p186 = scmp.lt.s32.totalorder %s183, 7
      %s187 = scalar_select %p186, %s183, 7
      %s188 = smul.addr %s185, 8
      %s189 = sadd.s32 %s187, %s188
      %s190 = smul.addr %s189, 8
      %s191 = scalar_lea.vmem %s2, %s190
      %p192 = pneg %p127
      %p193 = pneg %p124
      %p194 = scmp.lt.s32.totalorder %s19, 1
      %s195 = scalar_select %p194, %s19, 1
      %p196 = scmp.lt.s32.totalorder %s20, 3
      %s197 = scalar_select %p196, %s20, 3
      %s198 = smul.addr %s195, 4
      %s199 = sadd.s32 %s197, %s198
      %s200 = smul.addr %s199, 8
      %s201 = scalar_lea.vmem %s3, %s200
      %p202 = scmp.lt.s32.totalorder %s19, 1
      %s203 = scalar_select %p202, %s19, 1
      %p204 = scmp.lt.s32.totalorder %s20, 3
      %s205 = scalar_select %p204, %s20, 3
      %s206 = smul.addr %s205, 24
      %s207 = smul.addr %s203, 96
      %s208 = sadd.s32 %s206, %s207
      %s209 = smul.addr %s208, 8
      %s210 = scalar_lea.vmem %s0, %s209
      %s211 = smul.u32 2, %s20
      %p212 = scmp.lt.s32.totalorder %s19, 1
      %s213 = scalar_select %p212, %s19, 1
      %p214 = scmp.lt.s32.totalorder %s211, 7
      %s215 = scalar_select %p214, %s211, 7
      %s216 = smul.addr %s213, 8
      %s217 = sadd.s32 %s215, %s216
      %s218 = smul.addr %s217, 8
      %s219 = scalar_lea.vmem %s2, %s218
      %s220 = smul.u32 2, %s20
      %p221 = scmp.lt.s32.totalorder %s19, 1
      %s222 = scalar_select %p221, %s19, 1
      %p223 = scmp.lt.s32.totalorder %s20, 3
      %s224 = scalar_select %p223, %s20, 3
      %s225 = smul.addr %s222, 4
      %s226 = sadd.s32 %s224, %s225
      %s227 = smul.addr %s226, 8
      %s228 = scalar_lea.vmem %s3, %s227
      %v229 = vld [vmem:[%s210] sm:$0xff]
      %v230 = vld [vmem:[%s210 + $0x8] sm:$0xff]
      %v231 = vld [vmem:[%s210 + $0x10] sm:$0xff]
      %v232 = vld [vmem:[%s210 + $0x18] sm:$0xff]
      %v233 = vld [vmem:[%s210 + $0x20] sm:$0xff]
      %v234 = vld [vmem:[%s210 + $0x28] sm:$0xff]
      %v235 = vld [vmem:[%s210 + $0x30] sm:$0xff]
      %v236 = vld [vmem:[%s210 + $0x38] sm:$0xff]
      %v237 = vld [vmem:[%s210 + $0x40] sm:$0xff]
      %v238 = vld [vmem:[%s210 + $0x48] sm:$0xff]
      %v239 = vld [vmem:[%s210 + $0x50] sm:$0xff]
      %v240 = vld [vmem:[%s210 + $0x58] sm:$0xff]
      %v241 = vld [vmem:[%s210 + $0x60] sm:$0xff]
      %v242 = vld [vmem:[%s210 + $0x68] sm:$0xff]
      %v243 = vld [vmem:[%s210 + $0x70] sm:$0xff]
      %v244 = vld [vmem:[%s210 + $0x78] sm:$0xff]
      %v245 = vld [vmem:[%s210 + $0x80] sm:$0xff]
      %v246 = vld [vmem:[%s210 + $0x88] sm:$0xff]
      %v247 = vld [vmem:[%s210 + $0x90] sm:$0xff]
      %v248 = vld [vmem:[%s210 + $0x98] sm:$0xff]
      %v249 = vld [vmem:[%s210 + $0xa0] sm:$0xff]
      %v250 = vld [vmem:[%s210 + $0xa8] sm:$0xff]
      %v251 = vld [vmem:[%s210 + $0xb0] sm:$0xff]
      %v252 = vld [vmem:[%s210 + $0xb8] sm:$0xff]
      %v253 = vmul.f32 %v229, 0.25
      %v254 = vmul.f32 %v230, 0.25
      %v255 = vmul.f32 %v231, 0.25
      %v256 = vmul.f32 %v232, 0.25
      %v257 = vmul.f32 %v233, 0.25
      %v258 = vmul.f32 %v234, 0.25
      %v259 = vmul.f32 %v235, 0.25
      %v260 = vmul.f32 %v236, 0.25
      %v261 = vmul.f32 %v237, 0.25
      %v262 = vmul.f32 %v238, 0.25
      %v263 = vmul.f32 %v239, 0.25
      %v264 = vmul.f32 %v240, 0.25
      %v265 = vmul.f32 %v241, 0.25
      %v266 = vmul.f32 %v242, 0.25
      %v267 = vmul.f32 %v243, 0.25
      %v268 = vmul.f32 %v244, 0.25
      %v269 = vmul.f32 %v245, 0.25
      %v270 = vmul.f32 %v246, 0.25
      %v271 = vmul.f32 %v247, 0.25
      %v272 = vmul.f32 %v248, 0.25
      %v273 = vmul.f32 %v233, 0.75
      %v274 = vmul.f32 %v234, 0.75
      %v275 = vmul.f32 %v235, 0.75
      %v276 = vmul.f32 %v236, 0.75
      %v277 = vmul.f32 %v237, 0.75
      %v278 = vmul.f32 %v238, 0.75
      %v279 = vmul.f32 %v239, 0.75
      %v280 = vmul.f32 %v240, 0.75
      %v281 = vmul.f32 %v241, 0.75
      %v282 = vmul.f32 %v242, 0.75
      %v283 = vmul.f32 %v243, 0.75
      %v284 = vmul.f32 %v244, 0.75
      %v285 = vmul.f32 %v245, 0.75
      %v286 = vmul.f32 %v246, 0.75
      %v287 = vmul.f32 %v247, 0.75
      %v288 = vmul.f32 %v248, 0.75
      %v289 = vmul.f32 %v249, 0.75
      %v290 = vmul.f32 %v250, 0.75
      %v291 = vmul.f32 %v251, 0.75
      %v292 = vmul.f32 %v252, 0.75
      %v293 = vadd.f32 %v253, %v273
      %v294 = vadd.f32 %v254, %v274
      %v295 = vadd.f32 %v255, %v275
      %v296 = vadd.f32 %v256, %v276
      %v297 = vadd.f32 %v257, %v277
      %v298 = vadd.f32 %v258, %v278
      %v299 = vadd.f32 %v259, %v279
      %v300 = vadd.f32 %v260, %v280
      %v301 = vadd.f32 %v261, %v281
      %v302 = vadd.f32 %v262, %v282
      %v303 = vadd.f32 %v263, %v283
      %v304 = vadd.f32 %v264, %v284
      %v305 = vadd.f32 %v265, %v285
      %v306 = vadd.f32 %v266, %v286
      %v307 = vadd.f32 %v267, %v287
      %v308 = vadd.f32 %v268, %v288
      %v309 = vadd.f32 %v269, %v289
      %v310 = vadd.f32 %v270, %v290
      %v311 = vadd.f32 %v271, %v291
      %v312 = vadd.f32 %v272, %v292
      %v313 = vmul.f32 %v229, 0.75
      %v314 = vmul.f32 %v230, 0.75
      %v315 = vmul.f32 %v231, 0.75
      %v316 = vmul.f32 %v232, 0.75
      %v317 = vmul.f32 %v249, 0.25
      %v318 = vmul.f32 %v250, 0.25
      %v319 = vmul.f32 %v251, 0.25
      %v320 = vmul.f32 %v252, 0.25
      %v321 = vadd.f32 %v313, %v257
      %v322 = vadd.f32 %v314, %v258
      %v323 = vadd.f32 %v315, %v259
      %v324 = vadd.f32 %v316, %v260
      %v325 = vadd.f32 %v273, %v261
      %v326 = vadd.f32 %v274, %v262
      %v327 = vadd.f32 %v275, %v263
      %v328 = vadd.f32 %v276, %v264
      %v329 = vadd.f32 %v277, %v265
      %v330 = vadd.f32 %v278, %v266
      %v331 = vadd.f32 %v279, %v267
      %v332 = vadd.f32 %v280, %v268
      %v333 = vadd.f32 %v281, %v269
      %v334 = vadd.f32 %v282, %v270
      %v335 = vadd.f32 %v283, %v271
      %v336 = vadd.f32 %v284, %v272
      %v337 = vadd.f32 %v285, %v317
      %v338 = vadd.f32 %v286, %v318
      %v339 = vadd.f32 %v287, %v319
      %v340 = vadd.f32 %v288, %v320
      %p341 = scmp.eq.s32.totalorder %s20, 0
      %s342 = scalar_select %p341, 1, 0
      %v343 = vstv %s342
      %vm344 = vcmp.eq.s32.totalorder %v343, 1
      %p345 = scmp.eq.s32.totalorder %s20, 3
      %s346 = scalar_select %p345, 1, 0
      %v347 = vstv %s346
      %vm348 = vcmp.eq.s32.totalorder %v347, 1
      %v349 = vsel %vm344, 1, 0
      %v350 = vsel %vm348, 1, 0
      %vm351 = vcmp.eq.s32.totalorder %v349, 1
      %vm352 = vcmp.eq.s32.totalorder %v350, 1
      %v353 = vsel %vm351, 0.0, %v321
      %v354 = vsel %vm351, 0.0, %v322
      %v355 = vsel %vm351, 0.0, %v323
      %v356 = vsel %vm351, 0.0, %v324
      %v357 = vsel 0, 0.0, %v293
      %v358 = vsel 0, 0.0, %v294
      %v359 = vsel 0, 0.0, %v295
      %v360 = vsel 0, 0.0, %v296
      %v361 = vsel 0, 0.0, %v325
      %v362 = vsel 0, 0.0, %v326
      %v363 = vsel 0, 0.0, %v327
      %v364 = vsel 0, 0.0, %v328
      %v365 = vsel 0, 0.0, %v297
      %v366 = vsel 0, 0.0, %v298
      %v367 = vsel 0, 0.0, %v299
      %v368 = vsel 0, 0.0, %v300
      %v369 = vsel 0, 0.0, %v329
      %v370 = vsel 0, 0.0, %v330
      %v371 = vsel 0, 0.0, %v331
      %v372 = vsel 0, 0.0, %v332
      %v373 = vsel 0, 0.0, %v301
      %v374 = vsel 0, 0.0, %v302
      %v375 = vsel 0, 0.0, %v303
      %v376 = vsel 0, 0.0, %v304
      %v377 = vsel 0, 0.0, %v333
      %v378 = vsel 0, 0.0, %v334
      %v379 = vsel 0, 0.0, %v335
      %v380 = vsel 0, 0.0, %v336
      %v381 = vsel 0, 0.0, %v305
      %v382 = vsel 0, 0.0, %v306
      %v383 = vsel 0, 0.0, %v307
      %v384 = vsel 0, 0.0, %v308
      %v385 = vsel 0, 0.0, %v337
      %v386 = vsel 0, 0.0, %v338
      %v387 = vsel 0, 0.0, %v339
      %v388 = vsel 0, 0.0, %v340
      %v389 = vsel %vm352, 0.0, %v309
      %v390 = vsel %vm352, 0.0, %v310
      %v391 = vsel %vm352, 0.0, %v311
      %v392 = vsel %vm352, 0.0, %v312
      %vm433 = vcmask 1040384
      %v434 = vrot.slane %v353, 7
      %v435 = vrot.slane %v354, 7
      %v436 = vsel %vm433, %v434, %v435
      %v437 = vrot.slane %v355, 7
      %v438 = vsel %vm433, %v435, %v437
      %v439 = vrot.slane %v356, 7
      %v440 = vsel %vm433, %v437, %v439
      %v441 = vrot.slane %v357, 7
      %v442 = vrot.slane %v358, 7
      %v443 = vsel %vm433, %v441, %v442
      %v444 = vrot.slane %v359, 7
      %v445 = vsel %vm433, %v442, %v444
      %v446 = vrot.slane %v360, 7
      %v447 = vsel %vm433, %v444, %v446
      %v448 = vrot.slane %v361, 7
      %v449 = vrot.slane %v362, 7
      %v450 = vsel %vm433, %v448, %v449
      %v451 = vrot.slane %v363, 7
      %v452 = vsel %vm433, %v449, %v451
      %v453 = vrot.slane %v364, 7
      %v454 = vsel %vm433, %v451, %v453
      %v455 = vrot.slane %v365, 7
      %v456 = vrot.slane %v366, 7
      %v457 = vsel %vm433, %v455, %v456
      %v458 = vrot.slane %v367, 7
      %v459 = vsel %vm433, %v456, %v458
      %v460 = vrot.slane %v368, 7
      %v461 = vsel %vm433, %v458, %v460
      %v462 = vrot.slane %v369, 7
      %v463 = vrot.slane %v370, 7
      %v464 = vsel %vm433, %v462, %v463
      %v465 = vrot.slane %v371, 7
      %v466 = vsel %vm433, %v463, %v465
      %v467 = vrot.slane %v372, 7
      %v468 = vsel %vm433, %v465, %v467
      %v469 = vrot.slane %v373, 7
      %v470 = vrot.slane %v374, 7
      %v471 = vsel %vm433, %v469, %v470
      %v472 = vrot.slane %v375, 7
      %v473 = vsel %vm433, %v470, %v472
      %v474 = vrot.slane %v376, 7
      %v475 = vsel %vm433, %v472, %v474
      %v476 = vrot.slane %v377, 7
      %v477 = vrot.slane %v378, 7
      %v478 = vsel %vm433, %v476, %v477
      %v479 = vrot.slane %v379, 7
      %v480 = vsel %vm433, %v477, %v479
      %v481 = vrot.slane %v380, 7
      %v482 = vsel %vm433, %v479, %v481
      %v483 = vrot.slane %v381, 7
      %v484 = vrot.slane %v382, 7
      %v485 = vsel %vm433, %v483, %v484
      %v486 = vrot.slane %v383, 7
      %v487 = vsel %vm433, %v484, %v486
      %v488 = vrot.slane %v384, 7
      %v489 = vsel %vm433, %v486, %v488
      %v490 = vrot.slane %v385, 7
      %v491 = vrot.slane %v386, 7
      %v492 = vsel %vm433, %v490, %v491
      %v493 = vrot.slane %v387, 7
      %v494 = vsel %vm433, %v491, %v493
      %v495 = vrot.slane %v388, 7
      %v496 = vsel %vm433, %v493, %v495
      %v497 = vrot.slane %v389, 7
      %v498 = vrot.slane %v390, 7
      %v499 = vsel %vm433, %v497, %v498
      %v500 = vrot.slane %v391, 7
      %v501 = vsel %vm433, %v498, %v500
      %v502 = vrot.slane %v392, 7
      %v503 = vsel %vm433, %v500, %v502
      %v548 = vsel %vm433, 0.0, %v434
      %v549 = vsel %vm433, 0.0, %v441
      %v550 = vsel %vm433, 0.0, %v448
      %v551 = vsel %vm433, 0.0, %v455
      %v552 = vsel %vm433, 0.0, %v462
      %v553 = vsel %vm433, 0.0, %v469
      %v554 = vsel %vm433, 0.0, %v476
      %v555 = vsel %vm433, 0.0, %v483
      %v556 = vsel %vm433, 0.0, %v490
      %v557 = vsel %vm433, 0.0, %v497
      %v558 = vsel %vm433, %v439, 0.0
      %v559 = vsel %vm433, %v446, 0.0
      %v560 = vsel %vm433, %v453, 0.0
      %v561 = vsel %vm433, %v460, 0.0
      %v562 = vsel %vm433, %v467, 0.0
      %v563 = vsel %vm433, %v474, 0.0
      %v564 = vsel %vm433, %v481, 0.0
      %v565 = vsel %vm433, %v488, 0.0
      %v566 = vsel %vm433, %v495, 0.0
      %v567 = vsel %vm433, %v502, 0.0
      %vm584 = vcmask 1046528
      %v585 = vrot.slane %v548, 1
      %v586 = vrot.slane %v436, 1
      %v587 = vsel %vm584, %v585, %v586
      %v588 = vrot.slane %v438, 1
      %v589 = vsel %vm584, %v586, %v588
      %v590 = vrot.slane %v440, 1
      %v591 = vsel %vm584, %v588, %v590
      %v592 = vrot.slane %v558, 1
      %v593 = vsel %vm584, %v590, %v592
      %v594 = vrot.slane %v549, 1
      %v595 = vrot.slane %v443, 1
      %v596 = vsel %vm584, %v594, %v595
      %v597 = vrot.slane %v445, 1
      %v598 = vsel %vm584, %v595, %v597
      %v599 = vrot.slane %v447, 1
      %v600 = vsel %vm584, %v597, %v599
      %v601 = vrot.slane %v559, 1
      %v602 = vsel %vm584, %v599, %v601
      %v603 = vrot.slane %v550, 1
      %v604 = vrot.slane %v450, 1
      %v605 = vsel %vm584, %v603, %v604
      %v606 = vrot.slane %v452, 1
      %v607 = vsel %vm584, %v604, %v606
      %v608 = vrot.slane %v454, 1
      %v609 = vsel %vm584, %v606, %v608
      %v610 = vrot.slane %v560, 1
      %v611 = vsel %vm584, %v608, %v610
      %v612 = vrot.slane %v551, 1
      %v613 = vrot.slane %v457, 1
      %v614 = vsel %vm584, %v612, %v613
      %v615 = vrot.slane %v459, 1
      %v616 = vsel %vm584, %v613, %v615
      %v617 = vrot.slane %v461, 1
      %v618 = vsel %vm584, %v615, %v617
      %v619 = vrot.slane %v561, 1
      %v620 = vsel %vm584, %v617, %v619
      %v621 = vrot.slane %v552, 1
      %v622 = vrot.slane %v464, 1
      %v623 = vsel %vm584, %v621, %v622
      %v624 = vrot.slane %v466, 1
      %v625 = vsel %vm584, %v622, %v624
      %v626 = vrot.slane %v468, 1
      %v627 = vsel %vm584, %v624, %v626
      %v628 = vrot.slane %v562, 1
      %v629 = vsel %vm584, %v626, %v628
      %v630 = vrot.slane %v553, 1
      %v631 = vrot.slane %v471, 1
      %v632 = vsel %vm584, %v630, %v631
      %v633 = vrot.slane %v473, 1
      %v634 = vsel %vm584, %v631, %v633
      %v635 = vrot.slane %v475, 1
      %v636 = vsel %vm584, %v633, %v635
      %v637 = vrot.slane %v563, 1
      %v638 = vsel %vm584, %v635, %v637
      %v639 = vrot.slane %v554, 1
      %v640 = vrot.slane %v478, 1
      %v641 = vsel %vm584, %v639, %v640
      %v642 = vrot.slane %v480, 1
      %v643 = vsel %vm584, %v640, %v642
      %v644 = vrot.slane %v482, 1
      %v645 = vsel %vm584, %v642, %v644
      %v646 = vrot.slane %v564, 1
      %v647 = vsel %vm584, %v644, %v646
      %v648 = vrot.slane %v555, 1
      %v649 = vrot.slane %v485, 1
      %v650 = vsel %vm584, %v648, %v649
      %v651 = vrot.slane %v487, 1
      %v652 = vsel %vm584, %v649, %v651
      %v653 = vrot.slane %v489, 1
      %v654 = vsel %vm584, %v651, %v653
      %v655 = vrot.slane %v565, 1
      %v656 = vsel %vm584, %v653, %v655
      %657 = vrot.lane.b32.xlu0 %v587, 4
      %v658 = vpop.permute.xlu0 %657
      %659 = vrot.lane.b32.xlu0 %v589, 4
      %v660 = vpop.permute.xlu0 %659
      %661 = vrot.lane.b32.xlu0 %v591, 4
      %v662 = vpop.permute.xlu0 %661
      %663 = vrot.lane.b32.xlu0 %v593, 4
      %v664 = vpop.permute.xlu0 %663
      %665 = vrot.lane.b32.xlu0 %v596, 4
      %v666 = vpop.permute.xlu0 %665
      %667 = vrot.lane.b32.xlu0 %v598, 4
      %v668 = vpop.permute.xlu0 %667
      %669 = vrot.lane.b32.xlu0 %v600, 4
      %v670 = vpop.permute.xlu0 %669
      %671 = vrot.lane.b32.xlu0 %v602, 4
      %v672 = vpop.permute.xlu0 %671
      %673 = vrot.lane.b32.xlu0 %v605, 4
      %v674 = vpop.permute.xlu0 %673
      %675 = vrot.lane.b32.xlu0 %v607, 4
      %v676 = vpop.permute.xlu0 %675
      %677 = vrot.lane.b32.xlu0 %v609, 4
      %v678 = vpop.permute.xlu0 %677
      %679 = vrot.lane.b32.xlu0 %v611, 4
      %v680 = vpop.permute.xlu0 %679
      %681 = vrot.lane.b32.xlu0 %v614, 4
      %v682 = vpop.permute.xlu0 %681
      %683 = vrot.lane.b32.xlu0 %v616, 4
      %v684 = vpop.permute.xlu0 %683
      %685 = vrot.lane.b32.xlu0 %v618, 4
      %v686 = vpop.permute.xlu0 %685
      %687 = vrot.lane.b32.xlu0 %v620, 4
      %v688 = vpop.permute.xlu0 %687
      %689 = vrot.lane.b32.xlu0 %v623, 4
      %v690 = vpop.permute.xlu0 %689
      %691 = vrot.lane.b32.xlu0 %v625, 4
      %v692 = vpop.permute.xlu0 %691
      %693 = vrot.lane.b32.xlu0 %v627, 4
      %v694 = vpop.permute.xlu0 %693
      %695 = vrot.lane.b32.xlu0 %v629, 4
      %v696 = vpop.permute.xlu0 %695
      %697 = vrot.lane.b32.xlu0 %v632, 4
      %v698 = vpop.permute.xlu0 %697
      %699 = vrot.lane.b32.xlu0 %v634, 4
      %v700 = vpop.permute.xlu0 %699
      %701 = vrot.lane.b32.xlu0 %v636, 4
      %v702 = vpop.permute.xlu0 %701
      %703 = vrot.lane.b32.xlu0 %v638, 4
      %v704 = vpop.permute.xlu0 %703
      %705 = vrot.lane.b32.xlu0 %v641, 4
      %v706 = vpop.permute.xlu0 %705
      %707 = vrot.lane.b32.xlu0 %v643, 4
      %v708 = vpop.permute.xlu0 %707
      %709 = vrot.lane.b32.xlu0 %v645, 4
      %v710 = vpop.permute.xlu0 %709
      %711 = vrot.lane.b32.xlu0 %v647, 4
      %v712 = vpop.permute.xlu0 %711
      %713 = vrot.lane.b32.xlu0 %v650, 4
      %v714 = vpop.permute.xlu0 %713
      %715 = vrot.lane.b32.xlu0 %v652, 4
      %v716 = vpop.permute.xlu0 %715
      %717 = vrot.lane.b32.xlu0 %v654, 4
      %v718 = vpop.permute.xlu0 %717
      %719 = vrot.lane.b32.xlu0 %v656, 4
      %v720 = vpop.permute.xlu0 %719
      %vm753 = vcmask 1045504
      %v754 = vrot.slane %v548, 2
      %v755 = vrot.slane %v436, 2
      %v756 = vsel %vm753, %v754, %v755
      %v757 = vrot.slane %v438, 2
      %v758 = vsel %vm753, %v755, %v757
      %v759 = vrot.slane %v440, 2
      %v760 = vsel %vm753, %v757, %v759
      %v761 = vrot.slane %v558, 2
      %v762 = vsel %vm753, %v759, %v761
      %v763 = vrot.slane %v549, 2
      %v764 = vrot.slane %v443, 2
      %v765 = vsel %vm753, %v763, %v764
      %v766 = vrot.slane %v445, 2
      %v767 = vsel %vm753, %v764, %v766
      %v768 = vrot.slane %v447, 2
      %v769 = vsel %vm753, %v766, %v768
      %v770 = vrot.slane %v559, 2
      %v771 = vsel %vm753, %v768, %v770
      %v772 = vrot.slane %v550, 2
      %v773 = vrot.slane %v450, 2
      %v774 = vsel %vm753, %v772, %v773
      %v775 = vrot.slane %v452, 2
      %v776 = vsel %vm753, %v773, %v775
      %v777 = vrot.slane %v454, 2
      %v778 = vsel %vm753, %v775, %v777
      %v779 = vrot.slane %v560, 2
      %v780 = vsel %vm753, %v777, %v779
      %v781 = vrot.slane %v551, 2
      %v782 = vrot.slane %v457, 2
      %v783 = vsel %vm753, %v781, %v782
      %v784 = vrot.slane %v459, 2
      %v785 = vsel %vm753, %v782, %v784
      %v786 = vrot.slane %v461, 2
      %v787 = vsel %vm753, %v784, %v786
      %v788 = vrot.slane %v561, 2
      %v789 = vsel %vm753, %v786, %v788
      %v790 = vrot.slane %v552, 2
      %v791 = vrot.slane %v464, 2
      %v792 = vsel %vm753, %v790, %v791
      %v793 = vrot.slane %v466, 2
      %v794 = vsel %vm753, %v791, %v793
      %v795 = vrot.slane %v468, 2
      %v796 = vsel %vm753, %v793, %v795
      %v797 = vrot.slane %v562, 2
      %v798 = vsel %vm753, %v795, %v797
      %v799 = vrot.slane %v553, 2
      %v800 = vrot.slane %v471, 2
      %v801 = vsel %vm753, %v799, %v800
      %v802 = vrot.slane %v473, 2
      %v803 = vsel %vm753, %v800, %v802
      %v804 = vrot.slane %v475, 2
      %v805 = vsel %vm753, %v802, %v804
      %v806 = vrot.slane %v563, 2
      %v807 = vsel %vm753, %v804, %v806
      %v808 = vrot.slane %v554, 2
      %v809 = vrot.slane %v478, 2
      %v810 = vsel %vm753, %v808, %v809
      %v811 = vrot.slane %v480, 2
      %v812 = vsel %vm753, %v809, %v811
      %v813 = vrot.slane %v482, 2
      %v814 = vsel %vm753, %v811, %v813
      %v815 = vrot.slane %v564, 2
      %v816 = vsel %vm753, %v813, %v815
      %v817 = vrot.slane %v555, 2
      %v818 = vrot.slane %v485, 2
      %v819 = vsel %vm753, %v817, %v818
      %v820 = vrot.slane %v487, 2
      %v821 = vsel %vm753, %v818, %v820
      %v822 = vrot.slane %v489, 2
      %v823 = vsel %vm753, %v820, %v822
      %v824 = vrot.slane %v565, 2
      %v825 = vsel %vm753, %v822, %v824
      %826 = vrot.lane.b32.xlu0 %v756, 8
      %v827 = vpop.permute.xlu0 %826
      %828 = vrot.lane.b32.xlu0 %v758, 8
      %v829 = vpop.permute.xlu0 %828
      %830 = vrot.lane.b32.xlu0 %v760, 8
      %v831 = vpop.permute.xlu0 %830
      %832 = vrot.lane.b32.xlu0 %v762, 8
      %v833 = vpop.permute.xlu0 %832
      %834 = vrot.lane.b32.xlu0 %v765, 8
      %v835 = vpop.permute.xlu0 %834
      %836 = vrot.lane.b32.xlu0 %v767, 8
      %v837 = vpop.permute.xlu0 %836
      %838 = vrot.lane.b32.xlu0 %v769, 8
      %v839 = vpop.permute.xlu0 %838
      %840 = vrot.lane.b32.xlu0 %v771, 8
      %v841 = vpop.permute.xlu0 %840
      %842 = vrot.lane.b32.xlu0 %v774, 8
      %v843 = vpop.permute.xlu0 %842
      %844 = vrot.lane.b32.xlu0 %v776, 8
      %v845 = vpop.permute.xlu0 %844
      %846 = vrot.lane.b32.xlu0 %v778, 8
      %v847 = vpop.permute.xlu0 %846
      %848 = vrot.lane.b32.xlu0 %v780, 8
      %v849 = vpop.permute.xlu0 %848
      %850 = vrot.lane.b32.xlu0 %v783, 8
      %v851 = vpop.permute.xlu0 %850
      %852 = vrot.lane.b32.xlu0 %v785, 8
      %v853 = vpop.permute.xlu0 %852
      %854 = vrot.lane.b32.xlu0 %v787, 8
      %v855 = vpop.permute.xlu0 %854
      %856 = vrot.lane.b32.xlu0 %v789, 8
      %v857 = vpop.permute.xlu0 %856
      %858 = vrot.lane.b32.xlu0 %v792, 8
      %v859 = vpop.permute.xlu0 %858
      %860 = vrot.lane.b32.xlu0 %v794, 8
      %v861 = vpop.permute.xlu0 %860
      %862 = vrot.lane.b32.xlu0 %v796, 8
      %v863 = vpop.permute.xlu0 %862
      %864 = vrot.lane.b32.xlu0 %v798, 8
      %v865 = vpop.permute.xlu0 %864
      %866 = vrot.lane.b32.xlu0 %v801, 8
      %v867 = vpop.permute.xlu0 %866
      %868 = vrot.lane.b32.xlu0 %v803, 8
      %v869 = vpop.permute.xlu0 %868
      %870 = vrot.lane.b32.xlu0 %v805, 8
      %v871 = vpop.permute.xlu0 %870
      %872 = vrot.lane.b32.xlu0 %v807, 8
      %v873 = vpop.permute.xlu0 %872
      %874 = vrot.lane.b32.xlu0 %v810, 8
      %v875 = vpop.permute.xlu0 %874
      %876 = vrot.lane.b32.xlu0 %v812, 8
      %v877 = vpop.permute.xlu0 %876
      %878 = vrot.lane.b32.xlu0 %v814, 8
      %v879 = vpop.permute.xlu0 %878
      %880 = vrot.lane.b32.xlu0 %v816, 8
      %v881 = vpop.permute.xlu0 %880
      %882 = vrot.lane.b32.xlu0 %v819, 8
      %v883 = vpop.permute.xlu0 %882
      %884 = vrot.lane.b32.xlu0 %v821, 8
      %v885 = vpop.permute.xlu0 %884
      %886 = vrot.lane.b32.xlu0 %v823, 8
      %v887 = vpop.permute.xlu0 %886
      %888 = vrot.lane.b32.xlu0 %v825, 8
      %v889 = vpop.permute.xlu0 %888
      %923 = vrot.lane.b32.xlu0 %v549, 12
      %v924 = vpop.permute.xlu0 %923
      %925 = vrot.lane.b32.xlu0 %v443, 12
      %v926 = vpop.permute.xlu0 %925
      %927 = vrot.lane.b32.xlu0 %v445, 12
      %v928 = vpop.permute.xlu0 %927
      %929 = vrot.lane.b32.xlu0 %v447, 12
      %v930 = vpop.permute.xlu0 %929
      %931 = vrot.lane.b32.xlu0 %v550, 12
      %v932 = vpop.permute.xlu0 %931
      %933 = vrot.lane.b32.xlu0 %v450, 12
      %v934 = vpop.permute.xlu0 %933
      %935 = vrot.lane.b32.xlu0 %v452, 12
      %v936 = vpop.permute.xlu0 %935
      %937 = vrot.lane.b32.xlu0 %v454, 12
      %v938 = vpop.permute.xlu0 %937
      %939 = vrot.lane.b32.xlu0 %v551, 12
      %v940 = vpop.permute.xlu0 %939
      %941 = vrot.lane.b32.xlu0 %v457, 12
      %v942 = vpop.permute.xlu0 %941
      %943 = vrot.lane.b32.xlu0 %v459, 12
      %v944 = vpop.permute.xlu0 %943
      %945 = vrot.lane.b32.xlu0 %v461, 12
      %v946 = vpop.permute.xlu0 %945
      %947 = vrot.lane.b32.xlu0 %v552, 12
      %v948 = vpop.permute.xlu0 %947
      %949 = vrot.lane.b32.xlu0 %v464, 12
      %v950 = vpop.permute.xlu0 %949
      %951 = vrot.lane.b32.xlu0 %v466, 12
      %v952 = vpop.permute.xlu0 %951
      %953 = vrot.lane.b32.xlu0 %v468, 12
      %v954 = vpop.permute.xlu0 %953
      %955 = vrot.lane.b32.xlu0 %v553, 12
      %v956 = vpop.permute.xlu0 %955
      %957 = vrot.lane.b32.xlu0 %v471, 12
      %v958 = vpop.permute.xlu0 %957
      %959 = vrot.lane.b32.xlu0 %v473, 12
      %v960 = vpop.permute.xlu0 %959
      %961 = vrot.lane.b32.xlu0 %v475, 12
      %v962 = vpop.permute.xlu0 %961
      %963 = vrot.lane.b32.xlu0 %v554, 12
      %v964 = vpop.permute.xlu0 %963
      %965 = vrot.lane.b32.xlu0 %v478, 12
      %v966 = vpop.permute.xlu0 %965
      %967 = vrot.lane.b32.xlu0 %v480, 12
      %v968 = vpop.permute.xlu0 %967
      %969 = vrot.lane.b32.xlu0 %v482, 12
      %v970 = vpop.permute.xlu0 %969
      %971 = vrot.lane.b32.xlu0 %v555, 12
      %v972 = vpop.permute.xlu0 %971
      %973 = vrot.lane.b32.xlu0 %v485, 12
      %v974 = vpop.permute.xlu0 %973
      %975 = vrot.lane.b32.xlu0 %v487, 12
      %v976 = vpop.permute.xlu0 %975
      %977 = vrot.lane.b32.xlu0 %v489, 12
      %v978 = vpop.permute.xlu0 %977
      %979 = vrot.lane.b32.xlu0 %v556, 12
      %v980 = vpop.permute.xlu0 %979
      %981 = vrot.lane.b32.xlu0 %v492, 12
      %v982 = vpop.permute.xlu0 %981
      %983 = vrot.lane.b32.xlu0 %v494, 12
      %v984 = vpop.permute.xlu0 %983
      %985 = vrot.lane.b32.xlu0 %v496, 12
      %v986 = vpop.permute.xlu0 %985
      %v1020 = vrot.slane %v556, 1
      %v1021 = vrot.slane %v492, 1
      %v1022 = vsel %vm584, %v1020, %v1021
      %v1023 = vrot.slane %v494, 1
      %v1024 = vsel %vm584, %v1021, %v1023
      %v1025 = vrot.slane %v496, 1
      %v1026 = vsel %vm584, %v1023, %v1025
      %v1027 = vrot.slane %v566, 1
      %v1028 = vsel %vm584, %v1025, %v1027
      %1029 = vrot.lane.b32.xlu0 %v596, 16
      %v1030 = vpop.permute.xlu0 %1029
      %1031 = vrot.lane.b32.xlu0 %v598, 16
      %v1032 = vpop.permute.xlu0 %1031
      %1033 = vrot.lane.b32.xlu0 %v600, 16
      %v1034 = vpop.permute.xlu0 %1033
      %1035 = vrot.lane.b32.xlu0 %v602, 16
      %v1036 = vpop.permute.xlu0 %1035
      %1037 = vrot.lane.b32.xlu0 %v605, 16
      %v1038 = vpop.permute.xlu0 %1037
      %1039 = vrot.lane.b32.xlu0 %v607, 16
      %v1040 = vpop.permute.xlu0 %1039
      %1041 = vrot.lane.b32.xlu0 %v609, 16
      %v1042 = vpop.permute.xlu0 %1041
      %1043 = vrot.lane.b32.xlu0 %v611, 16
      %v1044 = vpop.permute.xlu0 %1043
      %1045 = vrot.lane.b32.xlu0 %v614, 16
      %v1046 = vpop.permute.xlu0 %1045
      %1047 = vrot.lane.b32.xlu0 %v616, 16
      %v1048 = vpop.permute.xlu0 %1047
      %1049 = vrot.lane.b32.xlu0 %v618, 16
      %v1050 = vpop.permute.xlu0 %1049
      %1051 = vrot.lane.b32.xlu0 %v620, 16
      %v1052 = vpop.permute.xlu0 %1051
      %1053 = vrot.lane.b32.xlu0 %v623, 16
      %v1054 = vpop.permute.xlu0 %1053
      %1055 = vrot.lane.b32.xlu0 %v625, 16
      %v1056 = vpop.permute.xlu0 %1055
      %1057 = vrot.lane.b32.xlu0 %v627, 16
      %v1058 = vpop.permute.xlu0 %1057
      %1059 = vrot.lane.b32.xlu0 %v629, 16
      %v1060 = vpop.permute.xlu0 %1059
      %1061 = vrot.lane.b32.xlu0 %v632, 16
      %v1062 = vpop.permute.xlu0 %1061
      %1063 = vrot.lane.b32.xlu0 %v634, 16
      %v1064 = vpop.permute.xlu0 %1063
      %1065 = vrot.lane.b32.xlu0 %v636, 16
      %v1066 = vpop.permute.xlu0 %1065
      %1067 = vrot.lane.b32.xlu0 %v638, 16
      %v1068 = vpop.permute.xlu0 %1067
      %1069 = vrot.lane.b32.xlu0 %v641, 16
      %v1070 = vpop.permute.xlu0 %1069
      %1071 = vrot.lane.b32.xlu0 %v643, 16
      %v1072 = vpop.permute.xlu0 %1071
      %1073 = vrot.lane.b32.xlu0 %v645, 16
      %v1074 = vpop.permute.xlu0 %1073
      %1075 = vrot.lane.b32.xlu0 %v647, 16
      %v1076 = vpop.permute.xlu0 %1075
      %1077 = vrot.lane.b32.xlu0 %v650, 16
      %v1078 = vpop.permute.xlu0 %1077
      %1079 = vrot.lane.b32.xlu0 %v652, 16
      %v1080 = vpop.permute.xlu0 %1079
      %1081 = vrot.lane.b32.xlu0 %v654, 16
      %v1082 = vpop.permute.xlu0 %1081
      %1083 = vrot.lane.b32.xlu0 %v656, 16
      %v1084 = vpop.permute.xlu0 %1083
      %1085 = vrot.lane.b32.xlu0 %v1022, 16
      %v1086 = vpop.permute.xlu0 %1085
      %1087 = vrot.lane.b32.xlu0 %v1024, 16
      %v1088 = vpop.permute.xlu0 %1087
      %1089 = vrot.lane.b32.xlu0 %v1026, 16
      %v1090 = vpop.permute.xlu0 %1089
      %1091 = vrot.lane.b32.xlu0 %v1028, 16
      %v1092 = vpop.permute.xlu0 %1091
      %v1125 = vrot.slane %v556, 2
      %v1126 = vrot.slane %v492, 2
      %v1127 = vsel %vm753, %v1125, %v1126
      %v1128 = vrot.slane %v494, 2
      %v1129 = vsel %vm753, %v1126, %v1128
      %v1130 = vrot.slane %v496, 2
      %v1131 = vsel %vm753, %v1128, %v1130
      %v1132 = vrot.slane %v566, 2
      %v1133 = vsel %vm753, %v1130, %v1132
      %1134 = vrot.lane.b32.xlu0 %v765, 20
      %v1135 = vpop.permute.xlu0 %1134
      %1136 = vrot.lane.b32.xlu0 %v767, 20
      %v1137 = vpop.permute.xlu0 %1136
      %1138 = vrot.lane.b32.xlu0 %v769, 20
      %v1139 = vpop.permute.xlu0 %1138
      %1140 = vrot.lane.b32.xlu0 %v771, 20
      %v1141 = vpop.permute.xlu0 %1140
      %1142 = vrot.lane.b32.xlu0 %v774, 20
      %v1143 = vpop.permute.xlu0 %1142
      %1144 = vrot.lane.b32.xlu0 %v776, 20
      %v1145 = vpop.permute.xlu0 %1144
      %1146 = vrot.lane.b32.xlu0 %v778, 20
      %v1147 = vpop.permute.xlu0 %1146
      %1148 = vrot.lane.b32.xlu0 %v780, 20
      %v1149 = vpop.permute.xlu0 %1148
      %1150 = vrot.lane.b32.xlu0 %v783, 20
      %v1151 = vpop.permute.xlu0 %1150
      %1152 = vrot.lane.b32.xlu0 %v785, 20
      %v1153 = vpop.permute.xlu0 %1152
      %1154 = vrot.lane.b32.xlu0 %v787, 20
      %v1155 = vpop.permute.xlu0 %1154
      %1156 = vrot.lane.b32.xlu0 %v789, 20
      %v1157 = vpop.permute.xlu0 %1156
      %1158 = vrot.lane.b32.xlu0 %v792, 20
      %v1159 = vpop.permute.xlu0 %1158
      %1160 = vrot.lane.b32.xlu0 %v794, 20
      %v1161 = vpop.permute.xlu0 %1160
      %1162 = vrot.lane.b32.xlu0 %v796, 20
      %v1163 = vpop.permute.xlu0 %1162
      %1164 = vrot.lane.b32.xlu0 %v798, 20
      %v1165 = vpop.permute.xlu0 %1164
      %1166 = vrot.lane.b32.xlu0 %v801, 20
      %v1167 = vpop.permute.xlu0 %1166
      %1168 = vrot.lane.b32.xlu0 %v803, 20
      %v1169 = vpop.permute.xlu0 %1168
      %1170 = vrot.lane.b32.xlu0 %v805, 20
      %v1171 = vpop.permute.xlu0 %1170
      %1172 = vrot.lane.b32.xlu0 %v807, 20
      %v1173 = vpop.permute.xlu0 %1172
      %1174 = vrot.lane.b32.xlu0 %v810, 20
      %v1175 = vpop.permute.xlu0 %1174
      %1176 = vrot.lane.b32.xlu0 %v812, 20
      %v1177 = vpop.permute.xlu0 %1176
      %1178 = vrot.lane.b32.xlu0 %v814, 20
      %v1179 = vpop.permute.xlu0 %1178
      %1180 = vrot.lane.b32.xlu0 %v816, 20
      %v1181 = vpop.permute.xlu0 %1180
      %1182 = vrot.lane.b32.xlu0 %v819, 20
      %v1183 = vpop.permute.xlu0 %1182
      %1184 = vrot.lane.b32.xlu0 %v821, 20
      %v1185 = vpop.permute.xlu0 %1184
      %1186 = vrot.lane.b32.xlu0 %v823, 20
      %v1187 = vpop.permute.xlu0 %1186
      %1188 = vrot.lane.b32.xlu0 %v825, 20
      %v1189 = vpop.permute.xlu0 %1188
      %1190 = vrot.lane.b32.xlu0 %v1127, 20
      %v1191 = vpop.permute.xlu0 %1190
      %1192 = vrot.lane.b32.xlu0 %v1129, 20
      %v1193 = vpop.permute.xlu0 %1192
      %1194 = vrot.lane.b32.xlu0 %v1131, 20
      %v1195 = vpop.permute.xlu0 %1194
      %1196 = vrot.lane.b32.xlu0 %v1133, 20
      %v1197 = vpop.permute.xlu0 %1196
      %1231 = vrot.lane.b32.xlu0 %v550, 24
      %v1232 = vpop.permute.xlu0 %1231
      %1233 = vrot.lane.b32.xlu0 %v450, 24
      %v1234 = vpop.permute.xlu0 %1233
      %1235 = vrot.lane.b32.xlu0 %v452, 24
      %v1236 = vpop.permute.xlu0 %1235
      %1237 = vrot.lane.b32.xlu0 %v454, 24
      %v1238 = vpop.permute.xlu0 %1237
      %1239 = vrot.lane.b32.xlu0 %v551, 24
      %v1240 = vpop.permute.xlu0 %1239
      %1241 = vrot.lane.b32.xlu0 %v457, 24
      %v1242 = vpop.permute.xlu0 %1241
      %1243 = vrot.lane.b32.xlu0 %v459, 24
      %v1244 = vpop.permute.xlu0 %1243
      %1245 = vrot.lane.b32.xlu0 %v461, 24
      %v1246 = vpop.permute.xlu0 %1245
      %1247 = vrot.lane.b32.xlu0 %v552, 24
      %v1248 = vpop.permute.xlu0 %1247
      %1249 = vrot.lane.b32.xlu0 %v464, 24
      %v1250 = vpop.permute.xlu0 %1249
      %1251 = vrot.lane.b32.xlu0 %v466, 24
      %v1252 = vpop.permute.xlu0 %1251
      %1253 = vrot.lane.b32.xlu0 %v468, 24
      %v1254 = vpop.permute.xlu0 %1253
      %1255 = vrot.lane.b32.xlu0 %v553, 24
      %v1256 = vpop.permute.xlu0 %1255
      %1257 = vrot.lane.b32.xlu0 %v471, 24
      %v1258 = vpop.permute.xlu0 %1257
      %1259 = vrot.lane.b32.xlu0 %v473, 24
      %v1260 = vpop.permute.xlu0 %1259
      %1261 = vrot.lane.b32.xlu0 %v475, 24
      %v1262 = vpop.permute.xlu0 %1261
      %1263 = vrot.lane.b32.xlu0 %v554, 24
      %v1264 = vpop.permute.xlu0 %1263
      %1265 = vrot.lane.b32.xlu0 %v478, 24
      %v1266 = vpop.permute.xlu0 %1265
      %1267 = vrot.lane.b32.xlu0 %v480, 24
      %v1268 = vpop.permute.xlu0 %1267
      %1269 = vrot.lane.b32.xlu0 %v482, 24
      %v1270 = vpop.permute.xlu0 %1269
      %1271 = vrot.lane.b32.xlu0 %v555, 24
      %v1272 = vpop.permute.xlu0 %1271
      %1273 = vrot.lane.b32.xlu0 %v485, 24
      %v1274 = vpop.permute.xlu0 %1273
      %1275 = vrot.lane.b32.xlu0 %v487, 24
      %v1276 = vpop.permute.xlu0 %1275
      %1277 = vrot.lane.b32.xlu0 %v489, 24
      %v1278 = vpop.permute.xlu0 %1277
      %1279 = vrot.lane.b32.xlu0 %v556, 24
      %v1280 = vpop.permute.xlu0 %1279
      %1281 = vrot.lane.b32.xlu0 %v492, 24
      %v1282 = vpop.permute.xlu0 %1281
      %1283 = vrot.lane.b32.xlu0 %v494, 24
      %v1284 = vpop.permute.xlu0 %1283
      %1285 = vrot.lane.b32.xlu0 %v496, 24
      %v1286 = vpop.permute.xlu0 %1285
      %1287 = vrot.lane.b32.xlu0 %v557, 24
      %v1288 = vpop.permute.xlu0 %1287
      %1289 = vrot.lane.b32.xlu0 %v499, 24
      %v1290 = vpop.permute.xlu0 %1289
      %1291 = vrot.lane.b32.xlu0 %v501, 24
      %v1292 = vpop.permute.xlu0 %1291
      %1293 = vrot.lane.b32.xlu0 %v503, 24
      %v1294 = vpop.permute.xlu0 %1293
      %v1328 = vrot.slane %v557, 1
      %v1329 = vrot.slane %v499, 1
      %v1330 = vsel %vm584, %v1328, %v1329
      %v1331 = vrot.slane %v501, 1
      %v1332 = vsel %vm584, %v1329, %v1331
      %v1333 = vrot.slane %v503, 1
      %v1334 = vsel %vm584, %v1331, %v1333
      %v1335 = vrot.slane %v567, 1
      %v1336 = vsel %vm584, %v1333, %v1335
      %1337 = vrot.lane.b32.xlu0 %v605, 28
      %v1338 = vpop.permute.xlu0 %1337
      %1339 = vrot.lane.b32.xlu0 %v607, 28
      %v1340 = vpop.permute.xlu0 %1339
      %1341 = vrot.lane.b32.xlu0 %v609, 28
      %v1342 = vpop.permute.xlu0 %1341
      %1343 = vrot.lane.b32.xlu0 %v611, 28
      %v1344 = vpop.permute.xlu0 %1343
      %1345 = vrot.lane.b32.xlu0 %v614, 28
      %v1346 = vpop.permute.xlu0 %1345
      %1347 = vrot.lane.b32.xlu0 %v616, 28
      %v1348 = vpop.permute.xlu0 %1347
      %1349 = vrot.lane.b32.xlu0 %v618, 28
      %v1350 = vpop.permute.xlu0 %1349
      %1351 = vrot.lane.b32.xlu0 %v620, 28
      %v1352 = vpop.permute.xlu0 %1351
      %1353 = vrot.lane.b32.xlu0 %v623, 28
      %v1354 = vpop.permute.xlu0 %1353
      %1355 = vrot.lane.b32.xlu0 %v625, 28
      %v1356 = vpop.permute.xlu0 %1355
      %1357 = vrot.lane.b32.xlu0 %v627, 28
      %v1358 = vpop.permute.xlu0 %1357
      %1359 = vrot.lane.b32.xlu0 %v629, 28
      %v1360 = vpop.permute.xlu0 %1359
      %1361 = vrot.lane.b32.xlu0 %v632, 28
      %v1362 = vpop.permute.xlu0 %1361
      %1363 = vrot.lane.b32.xlu0 %v634, 28
      %v1364 = vpop.permute.xlu0 %1363
      %1365 = vrot.lane.b32.xlu0 %v636, 28
      %v1366 = vpop.permute.xlu0 %1365
      %1367 = vrot.lane.b32.xlu0 %v638, 28
      %v1368 = vpop.permute.xlu0 %1367
      %1369 = vrot.lane.b32.xlu0 %v641, 28
      %v1370 = vpop.permute.xlu0 %1369
      %1371 = vrot.lane.b32.xlu0 %v643, 28
      %v1372 = vpop.permute.xlu0 %1371
      %1373 = vrot.lane.b32.xlu0 %v645, 28
      %v1374 = vpop.permute.xlu0 %1373
      %1375 = vrot.lane.b32.xlu0 %v647, 28
      %v1376 = vpop.permute.xlu0 %1375
      %1377 = vrot.lane.b32.xlu0 %v650, 28
      %v1378 = vpop.permute.xlu0 %1377
      %1379 = vrot.lane.b32.xlu0 %v652, 28
      %v1380 = vpop.permute.xlu0 %1379
      %1381 = vrot.lane.b32.xlu0 %v654, 28
      %v1382 = vpop.permute.xlu0 %1381
      %1383 = vrot.lane.b32.xlu0 %v656, 28
      %v1384 = vpop.permute.xlu0 %1383
      %1385 = vrot.lane.b32.xlu0 %v1022, 28
      %v1386 = vpop.permute.xlu0 %1385
      %1387 = vrot.lane.b32.xlu0 %v1024, 28
      %v1388 = vpop.permute.xlu0 %1387
      %1389 = vrot.lane.b32.xlu0 %v1026, 28
      %v1390 = vpop.permute.xlu0 %1389
      %1391 = vrot.lane.b32.xlu0 %v1028, 28
      %v1392 = vpop.permute.xlu0 %1391
      %1393 = vrot.lane.b32.xlu0 %v1330, 28
      %v1394 = vpop.permute.xlu0 %1393
      %1395 = vrot.lane.b32.xlu0 %v1332, 28
      %v1396 = vpop.permute.xlu0 %1395
      %1397 = vrot.lane.b32.xlu0 %v1334, 28
      %v1398 = vpop.permute.xlu0 %1397
      %1399 = vrot.lane.b32.xlu0 %v1336, 28
      %v1400 = vpop.permute.xlu0 %1399
      %v1433 = vrot.slane %v557, 2
      %v1434 = vrot.slane %v499, 2
      %v1435 = vsel %vm753, %v1433, %v1434
      %v1436 = vrot.slane %v501, 2
      %v1437 = vsel %vm753, %v1434, %v1436
      %v1438 = vrot.slane %v503, 2
      %v1439 = vsel %vm753, %v1436, %v1438
      %v1440 = vrot.slane %v567, 2
      %v1441 = vsel %vm753, %v1438, %v1440
      %1442 = vrot.lane.b32.xlu0 %v774, 32
      %v1443 = vpop.permute.xlu0 %1442
      %1444 = vrot.lane.b32.xlu0 %v776, 32
      %v1445 = vpop.permute.xlu0 %1444
      %1446 = vrot.lane.b32.xlu0 %v778, 32
      %v1447 = vpop.permute.xlu0 %1446
      %1448 = vrot.lane.b32.xlu0 %v780, 32
      %v1449 = vpop.permute.xlu0 %1448
      %1450 = vrot.lane.b32.xlu0 %v783, 32
      %v1451 = vpop.permute.xlu0 %1450
      %1452 = vrot.lane.b32.xlu0 %v785, 32
      %v1453 = vpop.permute.xlu0 %1452
      %1454 = vrot.lane.b32.xlu0 %v787, 32
      %v1455 = vpop.permute.xlu0 %1454
      %1456 = vrot.lane.b32.xlu0 %v789, 32
      %v1457 = vpop.permute.xlu0 %1456
      %1458 = vrot.lane.b32.xlu0 %v792, 32
      %v1459 = vpop.permute.xlu0 %1458
      %1460 = vrot.lane.b32.xlu0 %v794, 32
      %v1461 = vpop.permute.xlu0 %1460
      %1462 = vrot.lane.b32.xlu0 %v796, 32
      %v1463 = vpop.permute.xlu0 %1462
      %1464 = vrot.lane.b32.xlu0 %v798, 32
      %v1465 = vpop.permute.xlu0 %1464
      %1466 = vrot.lane.b32.xlu0 %v801, 32
      %v1467 = vpop.permute.xlu0 %1466
      %1468 = vrot.lane.b32.xlu0 %v803, 32
      %v1469 = vpop.permute.xlu0 %1468
      %1470 = vrot.lane.b32.xlu0 %v805, 32
      %v1471 = vpop.permute.xlu0 %1470
      %1472 = vrot.lane.b32.xlu0 %v807, 32
      %v1473 = vpop.permute.xlu0 %1472
      %1474 = vrot.lane.b32.xlu0 %v810, 32
      %v1475 = vpop.permute.xlu0 %1474
      %1476 = vrot.lane.b32.xlu0 %v812, 32
      %v1477 = vpop.permute.xlu0 %1476
      %1478 = vrot.lane.b32.xlu0 %v814, 32
      %v1479 = vpop.permute.xlu0 %1478
      %1480 = vrot.lane.b32.xlu0 %v816, 32
      %v1481 = vpop.permute.xlu0 %1480
      %1482 = vrot.lane.b32.xlu0 %v819, 32
      %v1483 = vpop.permute.xlu0 %1482
      %1484 = vrot.lane.b32.xlu0 %v821, 32
      %v1485 = vpop.permute.xlu0 %1484
      %1486 = vrot.lane.b32.xlu0 %v823, 32
      %v1487 = vpop.permute.xlu0 %1486
      %1488 = vrot.lane.b32.xlu0 %v825, 32
      %v1489 = vpop.permute.xlu0 %1488
      %1490 = vrot.lane.b32.xlu0 %v1127, 32
      %v1491 = vpop.permute.xlu0 %1490
      %1492 = vrot.lane.b32.xlu0 %v1129, 32
      %v1493 = vpop.permute.xlu0 %1492
      %1494 = vrot.lane.b32.xlu0 %v1131, 32
      %v1495 = vpop.permute.xlu0 %1494
      %1496 = vrot.lane.b32.xlu0 %v1133, 32
      %v1497 = vpop.permute.xlu0 %1496
      %1498 = vrot.lane.b32.xlu0 %v1435, 32
      %v1499 = vpop.permute.xlu0 %1498
      %1500 = vrot.lane.b32.xlu0 %v1437, 32
      %v1501 = vpop.permute.xlu0 %1500
      %1502 = vrot.lane.b32.xlu0 %v1439, 32
      %v1503 = vpop.permute.xlu0 %1502
      %1504 = vrot.lane.b32.xlu0 %v1441, 32
      %v1505 = vpop.permute.xlu0 %1504
      %vm1538 = vcmask 31744
      %v1539 = vsel %vm1538, %v548, %v658
      %v1540 = vsel %vm1538, %v436, %v660
      %v1541 = vsel %vm1538, %v438, %v662
      %v1542 = vsel %vm1538, %v440, %v664
      %v1543 = vsel %vm1538, %v549, %v666
      %v1544 = vsel %vm1538, %v443, %v668
      %v1545 = vsel %vm1538, %v445, %v670
      %v1546 = vsel %vm1538, %v447, %v672
      %v1547 = vsel %vm1538, %v550, %v674
      %v1548 = vsel %vm1538, %v450, %v676
      %v1549 = vsel %vm1538, %v452, %v678
      %v1550 = vsel %vm1538, %v454, %v680
      %v1551 = vsel %vm1538, %v551, %v682
      %v1552 = vsel %vm1538, %v457, %v684
      %v1553 = vsel %vm1538, %v459, %v686
      %v1554 = vsel %vm1538, %v461, %v688
      %v1555 = vsel %vm1538, %v552, %v690
      %v1556 = vsel %vm1538, %v464, %v692
      %v1557 = vsel %vm1538, %v466, %v694
      %v1558 = vsel %vm1538, %v468, %v696
      %v1559 = vsel %vm1538, %v553, %v698
      %v1560 = vsel %vm1538, %v471, %v700
      %v1561 = vsel %vm1538, %v473, %v702
      %v1562 = vsel %vm1538, %v475, %v704
      %v1563 = vsel %vm1538, %v554, %v706
      %v1564 = vsel %vm1538, %v478, %v708
      %v1565 = vsel %vm1538, %v480, %v710
      %v1566 = vsel %vm1538, %v482, %v712
      %v1567 = vsel %vm1538, %v555, %v714
      %v1568 = vsel %vm1538, %v485, %v716
      %v1569 = vsel %vm1538, %v487, %v718
      %v1570 = vsel %vm1538, %v489, %v720
      %vm1571 = vcmask 64512
      %v1572 = vsel %vm1571, %v1539, %v827
      %v1573 = vsel %vm1571, %v1540, %v829
      %v1574 = vsel %vm1571, %v1541, %v831
      %v1575 = vsel %vm1571, %v1542, %v833
      %v1576 = vsel %vm1571, %v1543, %v835
      %v1577 = vsel %vm1571, %v1544, %v837
      %v1578 = vsel %vm1571, %v1545, %v839
      %v1579 = vsel %vm1571, %v1546, %v841
      %v1580 = vsel %vm1571, %v1547, %v843
      %v1581 = vsel %vm1571, %v1548, %v845
      %v1582 = vsel %vm1571, %v1549, %v847
      %v1583 = vsel %vm1571, %v1550, %v849
      %v1584 = vsel %vm1571, %v1551, %v851
      %v1585 = vsel %vm1571, %v1552, %v853
      %v1586 = vsel %vm1571, %v1553, %v855
      %v1587 = vsel %vm1571, %v1554, %v857
      %v1588 = vsel %vm1571, %v1555, %v859
      %v1589 = vsel %vm1571, %v1556, %v861
      %v1590 = vsel %vm1571, %v1557, %v863
      %v1591 = vsel %vm1571, %v1558, %v865
      %v1592 = vsel %vm1571, %v1559, %v867
      %v1593 = vsel %vm1571, %v1560, %v869
      %v1594 = vsel %vm1571, %v1561, %v871
      %v1595 = vsel %vm1571, %v1562, %v873
      %v1596 = vsel %vm1571, %v1563, %v875
      %v1597 = vsel %vm1571, %v1564, %v877
      %v1598 = vsel %vm1571, %v1565, %v879
      %v1599 = vsel %vm1571, %v1566, %v881
      %v1600 = vsel %vm1571, %v1567, %v883
      %v1601 = vsel %vm1571, %v1568, %v885
      %v1602 = vsel %vm1571, %v1569, %v887
      %v1603 = vsel %vm1571, %v1570, %v889
      %vm1604 = vcmask 97280
      %v1605 = vsel %vm1604, %v1572, %v924
      %v1606 = vsel %vm1604, %v1573, %v926
      %v1607 = vsel %vm1604, %v1574, %v928
      %v1608 = vsel %vm1604, %v1575, %v930
      %v1609 = vsel %vm1604, %v1576, %v932
      %v1610 = vsel %vm1604, %v1577, %v934
      %v1611 = vsel %vm1604, %v1578, %v936
      %v1612 = vsel %vm1604, %v1579, %v938
      %v1613 = vsel %vm1604, %v1580, %v940
      %v1614 = vsel %vm1604, %v1581, %v942
      %v1615 = vsel %vm1604, %v1582, %v944
      %v1616 = vsel %vm1604, %v1583, %v946
      %v1617 = vsel %vm1604, %v1584, %v948
      %v1618 = vsel %vm1604, %v1585, %v950
      %v1619 = vsel %vm1604, %v1586, %v952
      %v1620 = vsel %vm1604, %v1587, %v954
      %v1621 = vsel %vm1604, %v1588, %v956
      %v1622 = vsel %vm1604, %v1589, %v958
      %v1623 = vsel %vm1604, %v1590, %v960
      %v1624 = vsel %vm1604, %v1591, %v962
      %v1625 = vsel %vm1604, %v1592, %v964
      %v1626 = vsel %vm1604, %v1593, %v966
      %v1627 = vsel %vm1604, %v1594, %v968
      %v1628 = vsel %vm1604, %v1595, %v970
      %v1629 = vsel %vm1604, %v1596, %v972
      %v1630 = vsel %vm1604, %v1597, %v974
      %v1631 = vsel %vm1604, %v1598, %v976
      %v1632 = vsel %vm1604, %v1599, %v978
      %v1633 = vsel %vm1604, %v1600, %v980
      %v1634 = vsel %vm1604, %v1601, %v982
      %v1635 = vsel %vm1604, %v1602, %v984
      %v1636 = vsel %vm1604, %v1603, %v986
      %vm1637 = vcmask 130048
      %v1638 = vsel %vm1637, %v1605, %v1030
      %v1639 = vsel %vm1637, %v1606, %v1032
      %v1640 = vsel %vm1637, %v1607, %v1034
      %v1641 = vsel %vm1637, %v1608, %v1036
      %v1642 = vsel %vm1637, %v1609, %v1038
      %v1643 = vsel %vm1637, %v1610, %v1040
      %v1644 = vsel %vm1637, %v1611, %v1042
      %v1645 = vsel %vm1637, %v1612, %v1044
      %v1646 = vsel %vm1637, %v1613, %v1046
      %v1647 = vsel %vm1637, %v1614, %v1048
      %v1648 = vsel %vm1637, %v1615, %v1050
      %v1649 = vsel %vm1637, %v1616, %v1052
      %v1650 = vsel %vm1637, %v1617, %v1054
      %v1651 = vsel %vm1637, %v1618, %v1056
      %v1652 = vsel %vm1637, %v1619, %v1058
      %v1653 = vsel %vm1637, %v1620, %v1060
      %v1654 = vsel %vm1637, %v1621, %v1062
      %v1655 = vsel %vm1637, %v1622, %v1064
      %v1656 = vsel %vm1637, %v1623, %v1066
      %v1657 = vsel %vm1637, %v1624, %v1068
      %v1658 = vsel %vm1637, %v1625, %v1070
      %v1659 = vsel %vm1637, %v1626, %v1072
      %v1660 = vsel %vm1637, %v1627, %v1074
      %v1661 = vsel %vm1637, %v1628, %v1076
      %v1662 = vsel %vm1637, %v1629, %v1078
      %v1663 = vsel %vm1637, %v1630, %v1080
      %v1664 = vsel %vm1637, %v1631, %v1082
      %v1665 = vsel %vm1637, %v1632, %v1084
      %v1666 = vsel %vm1637, %v1633, %v1086
      %v1667 = vsel %vm1637, %v1634, %v1088
      %v1668 = vsel %vm1637, %v1635, %v1090
      %v1669 = vsel %vm1637, %v1636, %v1092
      %vm1670 = vcmask 162816
      %v1671 = vsel %vm1670, %v1638, %v1135
      %v1672 = vsel %vm1670, %v1639, %v1137
      %v1673 = vsel %vm1670, %v1640, %v1139
      %v1674 = vsel %vm1670, %v1641, %v1141
      %v1675 = vsel %vm1670, %v1642, %v1143
      %v1676 = vsel %vm1670, %v1643, %v1145
      %v1677 = vsel %vm1670, %v1644, %v1147
      %v1678 = vsel %vm1670, %v1645, %v1149
      %v1679 = vsel %vm1670, %v1646, %v1151
      %v1680 = vsel %vm1670, %v1647, %v1153
      %v1681 = vsel %vm1670, %v1648, %v1155
      %v1682 = vsel %vm1670, %v1649, %v1157
      %v1683 = vsel %vm1670, %v1650, %v1159
      %v1684 = vsel %vm1670, %v1651, %v1161
      %v1685 = vsel %vm1670, %v1652, %v1163
      %v1686 = vsel %vm1670, %v1653, %v1165
      %v1687 = vsel %vm1670, %v1654, %v1167
      %v1688 = vsel %vm1670, %v1655, %v1169
      %v1689 = vsel %vm1670, %v1656, %v1171
      %v1690 = vsel %vm1670, %v1657, %v1173
      %v1691 = vsel %vm1670, %v1658, %v1175
      %v1692 = vsel %vm1670, %v1659, %v1177
      %v1693 = vsel %vm1670, %v1660, %v1179
      %v1694 = vsel %vm1670, %v1661, %v1181
      %v1695 = vsel %vm1670, %v1662, %v1183
      %v1696 = vsel %vm1670, %v1663, %v1185
      %v1697 = vsel %vm1670, %v1664, %v1187
      %v1698 = vsel %vm1670, %v1665, %v1189
      %v1699 = vsel %vm1670, %v1666, %v1191
      %v1700 = vsel %vm1670, %v1667, %v1193
      %v1701 = vsel %vm1670, %v1668, %v1195
      %v1702 = vsel %vm1670, %v1669, %v1197
      %vm1703 = vcmask 195584
      %v1704 = vsel %vm1703, %v1671, %v1232
      %v1705 = vsel %vm1703, %v1672, %v1234
      %v1706 = vsel %vm1703, %v1673, %v1236
      %v1707 = vsel %vm1703, %v1674, %v1238
      %v1708 = vsel %vm1703, %v1675, %v1240
      %v1709 = vsel %vm1703, %v1676, %v1242
      %v1710 = vsel %vm1703, %v1677, %v1244
      %v1711 = vsel %vm1703, %v1678, %v1246
      %v1712 = vsel %vm1703, %v1679, %v1248
      %v1713 = vsel %vm1703, %v1680, %v1250
      %v1714 = vsel %vm1703, %v1681, %v1252
      %v1715 = vsel %vm1703, %v1682, %v1254
      %v1716 = vsel %vm1703, %v1683, %v1256
      %v1717 = vsel %vm1703, %v1684, %v1258
      %v1718 = vsel %vm1703, %v1685, %v1260
      %v1719 = vsel %vm1703, %v1686, %v1262
      %v1720 = vsel %vm1703, %v1687, %v1264
      %v1721 = vsel %vm1703, %v1688, %v1266
      %v1722 = vsel %vm1703, %v1689, %v1268
      %v1723 = vsel %vm1703, %v1690, %v1270
      %v1724 = vsel %vm1703, %v1691, %v1272
      %v1725 = vsel %vm1703, %v1692, %v1274
      %v1726 = vsel %vm1703, %v1693, %v1276
      %v1727 = vsel %vm1703, %v1694, %v1278
      %v1728 = vsel %vm1703, %v1695, %v1280
      %v1729 = vsel %vm1703, %v1696, %v1282
      %v1730 = vsel %vm1703, %v1697, %v1284
      %v1731 = vsel %vm1703, %v1698, %v1286
      %v1732 = vsel %vm1703, %v1699, %v1288
      %v1733 = vsel %vm1703, %v1700, %v1290
      %v1734 = vsel %vm1703, %v1701, %v1292
      %v1735 = vsel %vm1703, %v1702, %v1294
      %vm1736 = vcmask 228352
      %v1737 = vsel %vm1736, %v1704, %v1338
      %v1738 = vsel %vm1736, %v1705, %v1340
      %v1739 = vsel %vm1736, %v1706, %v1342
      %v1740 = vsel %vm1736, %v1707, %v1344
      %v1741 = vsel %vm1736, %v1708, %v1346
      %v1742 = vsel %vm1736, %v1709, %v1348
      %v1743 = vsel %vm1736, %v1710, %v1350
      %v1744 = vsel %vm1736, %v1711, %v1352
      %v1745 = vsel %vm1736, %v1712, %v1354
      %v1746 = vsel %vm1736, %v1713, %v1356
      %v1747 = vsel %vm1736, %v1714, %v1358
      %v1748 = vsel %vm1736, %v1715, %v1360
      %v1749 = vsel %vm1736, %v1716, %v1362
      %v1750 = vsel %vm1736, %v1717, %v1364
      %v1751 = vsel %vm1736, %v1718, %v1366
      %v1752 = vsel %vm1736, %v1719, %v1368
      %v1753 = vsel %vm1736, %v1720, %v1370
      %v1754 = vsel %vm1736, %v1721, %v1372
      %v1755 = vsel %vm1736, %v1722, %v1374
      %v1756 = vsel %vm1736, %v1723, %v1376
      %v1757 = vsel %vm1736, %v1724, %v1378
      %v1758 = vsel %vm1736, %v1725, %v1380
      %v1759 = vsel %vm1736, %v1726, %v1382
      %v1760 = vsel %vm1736, %v1727, %v1384
      %v1761 = vsel %vm1736, %v1728, %v1386
      %v1762 = vsel %vm1736, %v1729, %v1388
      %v1763 = vsel %vm1736, %v1730, %v1390
      %v1764 = vsel %vm1736, %v1731, %v1392
      %v1765 = vsel %vm1736, %v1732, %v1394
      %v1766 = vsel %vm1736, %v1733, %v1396
      %v1767 = vsel %vm1736, %v1734, %v1398
      %v1768 = vsel %vm1736, %v1735, %v1400
      %vm1769 = vcmask 261120
      %v1770 = vsel %vm1769, %v1737, %v1443
      %v1771 = vsel %vm1769, %v1738, %v1445
      %v1772 = vsel %vm1769, %v1739, %v1447
      %v1773 = vsel %vm1769, %v1740, %v1449
      %v1774 = vsel %vm1769, %v1741, %v1451
      %v1775 = vsel %vm1769, %v1742, %v1453
      %v1776 = vsel %vm1769, %v1743, %v1455
      %v1777 = vsel %vm1769, %v1744, %v1457
      %v1778 = vsel %vm1769, %v1745, %v1459
      %v1779 = vsel %vm1769, %v1746, %v1461
      %v1780 = vsel %vm1769, %v1747, %v1463
      %v1781 = vsel %vm1769, %v1748, %v1465
      %v1782 = vsel %vm1769, %v1749, %v1467
      %v1783 = vsel %vm1769, %v1750, %v1469
      %v1784 = vsel %vm1769, %v1751, %v1471
      %v1785 = vsel %vm1769, %v1752, %v1473
      %v1786 = vsel %vm1769, %v1753, %v1475
      %v1787 = vsel %vm1769, %v1754, %v1477
      %v1788 = vsel %vm1769, %v1755, %v1479
      %v1789 = vsel %vm1769, %v1756, %v1481
      %v1790 = vsel %vm1769, %v1757, %v1483
      %v1791 = vsel %vm1769, %v1758, %v1485
      %v1792 = vsel %vm1769, %v1759, %v1487
      %v1793 = vsel %vm1769, %v1760, %v1489
      %v1794 = vsel %vm1769, %v1761, %v1491
      %v1795 = vsel %vm1769, %v1762, %v1493
      %v1796 = vsel %vm1769, %v1763, %v1495
      %v1797 = vsel %vm1769, %v1764, %v1497
      %v1798 = vsel %vm1769, %v1765, %v1499
      %v1799 = vsel %vm1769, %v1766, %v1501
      %v1800 = vsel %vm1769, %v1767, %v1503
      %v1801 = vsel %vm1769, %v1768, %v1505
      %v1802 = vld [vmem:[%s1] sm:$0xff]
      %vm1803 = vcmask 293888
      %v1805 = vsel %vm1803, %v1802, 0
      %v1808 = vsel %vm1803, %v1770, 0
      %v1811 = vsel %vm1803, %v1771, 0
      %v1814 = vsel %vm1803, %v1772, 0
      %v1817 = vsel %vm1803, %v1773, 0
      %v1820 = vsel %vm1803, %v1774, 0
      %v1823 = vsel %vm1803, %v1775, 0
      %v1826 = vsel %vm1803, %v1776, 0
      %v1829 = vsel %vm1803, %v1777, 0
      %v1832 = vsel %vm1803, %v1778, 0
      %v1835 = vsel %vm1803, %v1779, 0
      %v1838 = vsel %vm1803, %v1780, 0
      %v1841 = vsel %vm1803, %v1781, 0
      %v1844 = vsel %vm1803, %v1782, 0
      %v1847 = vsel %vm1803, %v1783, 0
      %v1850 = vsel %vm1803, %v1784, 0
      %v1853 = vsel %vm1803, %v1785, 0
      %v1856 = vsel %vm1803, %v1786, 0
      %v1859 = vsel %vm1803, %v1787, 0
      %v1862 = vsel %vm1803, %v1788, 0
      %v1865 = vsel %vm1803, %v1789, 0
      %v1868 = vsel %vm1803, %v1790, 0
      %v1871 = vsel %vm1803, %v1791, 0
      %v1874 = vsel %vm1803, %v1792, 0
      %v1877 = vsel %vm1803, %v1793, 0
      %v1880 = vsel %vm1803, %v1794, 0
      %v1883 = vsel %vm1803, %v1795, 0
      %v1886 = vsel %vm1803, %v1796, 0
      %v1889 = vsel %vm1803, %v1797, 0
      %v1892 = vsel %vm1803, %v1798, 0
      %v1895 = vsel %vm1803, %v1799, 0
      %v1898 = vsel %vm1803, %v1800, 0
      %v1901 = vsel %vm1803, %v1801, 0
      %1903 = vmatpush.xpose.msra.mxu0 %v1853
      %1904 = vmatpush.xpose.msra.mxu0 %v1850
      %1905 = vmatpush.xpose.msra.mxu0 %v1847
      %1906 = vmatpush.xpose.msra.mxu0 %v1844
      %1907 = vmatpush.xpose.msra.mxu0 %v1841
      %1908 = vmatpush.xpose.msra.mxu0 %v1838
      %1909 = vmatpush.xpose.msra.mxu0 %v1835
      %1910 = vmatpush.xpose.msra.mxu0 %v1832
      %1911 = vmatpush.xpose.msra.mxu0 %v1829
      %1912 = vmatpush.xpose.msra.mxu0 %v1826
      %1913 = vmatpush.xpose.msra.mxu0 %v1823
      %1914 = vmatpush.xpose.msra.mxu0 %v1820
      %1915 = vmatpush.xpose.msra.mxu0 %v1817
      %1916 = vmatpush.xpose.msra.mxu0 %v1814
      %1917 = vmatpush.xpose.msra.mxu0 %v1811
      %1918 = vmatpush.xpose.msra.mxu0 %v1808
      %1919 = vmatmul.f32.gmra.mxu0 %v1805
      %v1920 = vpop.f32.mrf.mxu0
      %v1921 = vadd.f32 0.0, %v1920
      %1922 = vdwg.mxu0
      %1923 = vmatpush.xpose.msra.mxu0 %v1901
      %1924 = vmatpush.xpose.msra.mxu0 %v1898
      %1925 = vmatpush.xpose.msra.mxu0 %v1895
      %1926 = vmatpush.xpose.msra.mxu0 %v1892
      %1927 = vmatpush.xpose.msra.mxu0 %v1889
      %1928 = vmatpush.xpose.msra.mxu0 %v1886
      %1929 = vmatpush.xpose.msra.mxu0 %v1883
      %1930 = vmatpush.xpose.msra.mxu0 %v1880
      %1931 = vmatpush.xpose.msra.mxu0 %v1877
      %1932 = vmatpush.xpose.msra.mxu0 %v1874
      %1933 = vmatpush.xpose.msra.mxu0 %v1871
      %1934 = vmatpush.xpose.msra.mxu0 %v1868
      %1935 = vmatpush.xpose.msra.mxu0 %v1865
      %1936 = vmatpush.xpose.msra.mxu0 %v1862
      %1937 = vmatpush.xpose.msra.mxu0 %v1859
      %1938 = vmatpush.xpose.msra.mxu0 %v1856
      %1939 = vmatmul.f32.gmra.mxu0 %v1805
      %v1940 = vpop.f32.mrf.mxu0
      %v1941 = vadd.f32 0.0, %v1940
      %1942 = vdwg.mxu0
      %1943 = vst [vmem:[%s219] sm:$0xff] %v1921
      %1944 = vst [vmem:[%s219 + $0x8] sm:$0xff] %v1941
      %v1945 = vadd.f32 %v1921, %v1941
      %1946 = vadd.xlane.f32.xlu0 %v1945
      %v1947 = vpop.xlane.xlu0 %1946
      %v1948 = vmul.f32 %v1921, %v1921
      %v1949 = vmul.f32 %v1941, %v1941
      %v1950 = vadd.f32 %v1948, %v1949
      %1951 = vadd.xlane.f32.xlu0 %v1950
      %v1952 = vpop.xlane.xlu0 %1951
      %vm1953 = vcmask 7168
      %v1954 = vsel %vm1953, %v1947, %v1952
      %vm1955 = vcmask 15360
      %1956 = vst.msk [vmem:[%s228] sm:$0xff] %vm1955, %v1954
      %s1957 = smul.u32 2, %s20
      %p1958 = scmp.lt.s32.totalorder %s19, 1
      %s1959 = scalar_select %p1958, %s19, 1
      %p1960 = scmp.lt.s32.totalorder %s1957, 7
      %s1961 = scalar_select %p1960, %s1957, 7
      %s1962 = smul.addr %s1959, 8
      %s1963 = sadd.s32 %s1961, %s1962
      %s1964 = smul.addr %s1963, 8
      %s1965 = scalar_lea.vmem %s2, %s1964
      %p1966 = scmp.lt.s32.totalorder %s19, 1
      %s1967 = scalar_select %p1966, %s19, 1
      %p1968 = scmp.lt.s32.totalorder %s20, 3
      %s1969 = scalar_select %p1968, %s20, 3
      %s1970 = smul.addr %s1967, 4
      %s1971 = sadd.s32 %s1969, %s1970
      %s1972 = smul.addr %s1971, 8
      %s1973 = scalar_lea.vmem %s3, %s1972
      // Predicated region
      $region29: #{up_conv_block_forward.2} parent=27 // pred_check
        %p1974 = pneg %p96
      $region30: #{up_conv_block_forward.2} parent=27 // pred_check_branch
        %1976 = sbr.rel (%p1974) target = $region32
      $region31: #{up_conv_block_forward.2} parent=27 // pred_region
        %s1977 = smul.u32 2, %s20
      $region32: #{up_conv_block_forward.2} parent=27 // pred_fallthru
        _
      // Predicated region
      $region33: #{up_conv_block_forward.2} parent=27 // pred_check
        %p1978 = pneg %p124
      $region34: #{up_conv_block_forward.2} parent=27 // pred_check_branch
        %1980 = sbr.rel (%p1978) target = $region36
      $region35: #{up_conv_block_forward.2} parent=27 // pred_region
        _
      $region36: #{up_conv_block_forward.2} parent=27 // pred_fallthru
        _
    $region28: #{up_conv_block_forward.2} parent=5 // pred_fallthru
      _
    %p1981 = scmp.le.s32.totalorder 2, %s10
    // Predicated region
    $region37: #{up_conv_block_forward.2} parent=5 // pred_check
      %p1982 = pneg %p1981
    $region38: #{up_conv_block_forward.2} parent=5 // pred_check_branch
      %1984 = sbr.rel (%p1982) target = $region40
    $region39: #{up_conv_block_forward.2} parent=5 // pred_region
      %s1985 = ssub.s32 %s10, 2
      // Predicated region
      $region41: #{up_conv_block_forward.2} parent=39 // pred_check
        %p1986 = pneg %p102
      $region42: #{up_conv_block_forward.2} parent=39 // pred_check_branch
        %1988 = sbr.rel (%p1986) target = $region44
      $region43: #{up_conv_block_forward.2} parent=39 // pred_region
        %s1989 = smul.u32 2, %s22
        %p1990 = scmp.lt.s32.totalorder %s21, 1
        %s1991 = scalar_select %p1990, %s21, 1
        %p1992 = scmp.lt.s32.totalorder %s1989, 7
        %s1993 = scalar_select %p1992, %s1989, 7
        %s1994 = smul.addr %s1991, 8
        %s1995 = sadd.s32 %s1993, %s1994
        %s1996 = smul.addr %s1995, 8
        %s1997 = scalar_lea.vmem %s2, %s1996
      $region44: #{up_conv_block_forward.2} parent=39 // pred_fallthru
        _
      // Predicated region
      $region45: #{up_conv_block_forward.2} parent=39 // pred_check
        %p1998 = pneg %p130
      $region46: #{up_conv_block_forward.2} parent=39 // pred_check_branch
        %2000 = sbr.rel (%p1998) target = $region48
      $region47: #{up_conv_block_forward.2} parent=39 // pred_region
        %p2001 = scmp.lt.s32.totalorder %s21, 1
        %s2002 = scalar_select %p2001, %s21, 1
        %p2003 = scmp.lt.s32.totalorder %s22, 3
        %s2004 = scalar_select %p2003, %s22, 3
        %s2005 = smul.addr %s2002, 4
        %s2006 = sadd.s32 %s2004, %s2005
        %s2007 = smul.addr %s2006, 8
        %s2008 = scalar_lea.vmem %s3, %s2007
      $region48: #{up_conv_block_forward.2} parent=39 // pred_fallthru
        _
    $region40: #{up_conv_block_forward.2} parent=5 // pred_fallthru
      _
  $region6: #{up_conv_block_forward.2} parent=0 // loop_footer
    %s14 = sadd.s32 1, %s10
  $region7: #{up_conv_block_forward.2} parent=0 // loop_footer_branch
    %9 = sbr.rel target = $region3
  $region8: #{up_conv_block_forward.2} parent=0 // loop_exit
    _

</llo_original>
